<compile_context>
chip_gen: v5e
topology: v5e:2x2
jax: 0.10.0
libtpu: 0.0.40
codegen_flags: <defaults>
</compile_context>

<pallas_src>
import functools

import jax
import jax.numpy as jnp
from jax import lax
from jax.experimental import pallas as pl
from jax.experimental.pallas import tpu as pltpu


# ----------------------------------------------------------------------------
# Pallas kernel: 2-layer LSTM recurrence + head-projection epilogue
# ----------------------------------------------------------------------------
def _normal_skew_kernel(x_ref, wih0_ref, whh0_ref, b0_ref, wih1_ref, whh1_ref,
                        b1_ref, whead_ref, bhead_ref, out_ref,
                        xg0_ref, hlast_ref, *,
                        hidden_size, batch, seq_len, output_size):
    H, B, S, OUT = hidden_size, batch, seq_len, output_size

    # Recurrent weights stay resident across the unrolled time loop (bf16 MXU
    # operands, pre-cast in the wrapper).
    whh0 = whh0_ref[...]          # (H, 4H) bf16
    wih1 = wih1_ref[...]          # (H, 4H) bf16
    whh1 = whh1_ref[...]          # (H, 4H) bf16

    # Hoisted layer-0 input projection: one (S*B, I) @ (I, 4H) matmul, bias
    # folded in (broadcast emitted exactly once).  Kept f32: it is off the
    # per-step critical path and carries the largest-magnitude operands.
    xg0_ref[...] = (jnp.dot(x_ref[...], wih0_ref[...],
                            preferred_element_type=jnp.float32)
                    + b0_ref[...])

    # Hoist the layer-1 bias broadcast (JAX does not CSE broadcast_in_dim).
    b1 = jnp.broadcast_to(b1_ref[...], (B, 4 * H))

    def gates_to_hc(gates, c_prev):
        # The i/f/o gate columns of every weight/bias were pre-scaled by 0.5 in
        # the wrapper, so sigmoid(x) = 0.5*tanh(x/2) + 0.5 lets a SINGLE
        # full-width tanh over the whole (B, 4H) vreg cover all four gates
        # (PyTorch gate order [i, f, g, o]); i/f/o are recovered with cheap VPU
        # FMAs.  Only tanh(c_new) remains as a second, partial-width EUP op.
        t = jnp.tanh(gates)
        ti = t[:, 0 * H:1 * H]
        tf = t[:, 1 * H:2 * H]
        tg = t[:, 2 * H:3 * H]
        to = t[:, 3 * H:4 * H]
        c_new = (0.5 * tf + 0.5) * c_prev + (0.5 * ti + 0.5) * tg
        h_new = (0.5 * to + 0.5) * jnp.tanh(c_new)
        return h_new, c_new

    def body(t, carry):
        h0, c0, h1, c1 = carry
        row = pl.multiple_of(t * B, B)                       # sublane-aligned

        # Layer 0: input projection precomputed; only h0 @ whh0 on the chain.
        g0 = xg0_ref[pl.ds(row, B), :] + jnp.dot(
            h0.astype(jnp.bfloat16), whh0, preferred_element_type=jnp.float32)
        h0n, c0n = gates_to_hc(g0, c0)

        # Layer 1: two separate dots — the h1_prev @ whh1 push has no data
        # dependence on layer 0, so it overlaps layer-0 activation work.
        g1 = (jnp.dot(h1.astype(jnp.bfloat16), whh1,
                      preferred_element_type=jnp.float32)
              + jnp.dot(h0n.astype(jnp.bfloat16), wih1,
                        preferred_element_type=jnp.float32)
              + b1)
        h1n, c1n = gates_to_hc(g1, c1)

        # Only the last `output_size` steps feed the heads — skip other stores
        # (output stores are masked vst.msk at 32 lanes; halving them is free).
        @pl.when(t >= S - OUT)
        def _():
            orow = pl.multiple_of((t - (S - OUT)) * B, B)
            hlast_ref[pl.ds(orow, B), :] = h1n

        return h0n, c0n, h1n, c1n

    z = jnp.zeros((B, H), jnp.float32)
    lax.fori_loop(0, S, body, (z, z, z, z), unroll=True)

    # Head-projection epilogue: one tiny (OUT*B, H) @ (H, 4) MXU push; the
    # clip/softplus/min transforms stay in the wrapper.
    out_ref[...] = (jnp.dot(hlast_ref[...], whead_ref[...],
                            preferred_element_type=jnp.float32)
                    + bhead_ref[...])


# ----------------------------------------------------------------------------
# Wrapper
# ----------------------------------------------------------------------------
def normal_skew_forward(x, params, *, hidden_size, output_size):
    """x: (B, S, input_size) batch-first (PyTorch convention)."""
    B, S, I = x.shape
    H = hidden_size
    OUT = output_size
    Bp = max(8, -(-B // 8) * 8)                              # pad batch to sublanes

    x_tm = jnp.transpose(x, (1, 0, 2)).astype(jnp.float32)   # (S, B, I) time-major
    if Bp != B:
        x_tm = jnp.pad(x_tm, ((0, 0), (0, Bp - B), (0, 0)))
    x2d = x_tm.reshape(S * Bp, I)                            # (S*Bp, I)

    # sigmoid -> tanh fold: scale the i/f/o gate columns (PyTorch order
    # [i, f, g, o]) of every LSTM weight/bias by 0.5 so the kernel can use a
    # single full-width tanh.  0.5 is exactly representable -> exact identity.
    fold = jnp.concatenate(
        [jnp.full((1, H), 0.5, jnp.float32), jnp.full((1, H), 0.5, jnp.float32),
         jnp.ones((1, H), jnp.float32), jnp.full((1, H), 0.5, jnp.float32)],
        axis=1)                                              # (1, 4H)
    wih0 = params['wih0'] * fold
    whh0 = params['whh0'] * fold
    b0 = params['b0'] * fold
    wih1 = params['wih1'] * fold
    whh1 = params['whh1'] * fold
    b1 = params['b1'] * fold

    # bf16 MXU operands for the per-step recurrent dots (v6e/v7x MXU is
    # bf16-native; f32 takes the multi-pass path).  State/activations stay f32.
    whh0_bf = whh0.astype(jnp.bfloat16)
    wih1_bf = wih1.astype(jnp.bfloat16)
    whh1_bf = whh1.astype(jnp.bfloat16)

    kernel = functools.partial(_normal_skew_kernel, hidden_size=H, batch=Bp,
                               seq_len=S, output_size=OUT)
    vmem = pl.BlockSpec(memory_space=pltpu.MemorySpace.VMEM)
    heads2d = pl.pallas_call(
        kernel,
        out_shape=jax.ShapeDtypeStruct((OUT * Bp, 4), jnp.float32),
        in_specs=[vmem] * 9,
        out_specs=vmem,
        scratch_shapes=[pltpu.VMEM((S * Bp, 4 * H), jnp.float32),   # xg0
                        pltpu.VMEM((OUT * Bp, H), jnp.float32)],    # h1 (last OUT steps)
    )(x2d, wih0, whh0_bf, b0, wih1_bf, whh1_bf, b1,
      params['whead'], params['bhead'])

    heads = heads2d.reshape(OUT, Bp, 4)[:, :B, :]            # (OUT, B, 4)
    heads = jnp.transpose(heads, (1, 0, 2))                  # (B, OUT, 4)
    sp = jax.nn.softplus(heads[..., 2:4])                    # only the 2 cols needing it
    return {
        'skew': jnp.clip(heads[..., 0:1], -3.0, 3.0),
        'loc': heads[..., 1:2],
        'tailweight': 0.001 + jnp.minimum(sp[..., 0:1], 5.0),
        'scale': 0.001 + sp[..., 1:2],
    }


# ----------------------------------------------------------------------------
# Deterministic parameter init (PyTorch-like uniform(-1/sqrt(H), 1/sqrt(H)))
# ----------------------------------------------------------------------------
def init_params(key, input_size, hidden_size):
    H = hidden_size
    bound = 1.0 / jnp.sqrt(jnp.float32(H))
    ks = jax.random.split(key, 10)
    u = lambda k, shape: jax.random.uniform(k, shape, jnp.float32, -bound, bound)
    return {
        # layer 0 (input_size -> H), gate order [i, f, g, o], right-multiply form
        'wih0': u(ks[0], (input_size, 4 * H)),
        'whh0': u(ks[1], (H, 4 * H)),
        'b0':   u(ks[2], (1, 4 * H)) + u(ks[3], (1, 4 * H)),   # bias_ih + bias_hh
        # layer 1 (H -> H)
        'wih1': u(ks[4], (H, 4 * H)),
        'whh1': u(ks[5], (H, 4 * H)),
        'b1':   u(ks[6], (1, 4 * H)) + u(ks[7], (1, 4 * H)),
        # heads stacked: columns [skew, loc, tailweight, scale]
        'whead': u(ks[8], (H, 4)),
        'bhead': u(ks[9], (1, 4)),
    }


# ----------------------------------------------------------------------------
# Pure-JAX reference (same math, no Pallas, all f32) for the correctness check
# ----------------------------------------------------------------------------
def ref_forward(x, p, *, hidden_size, output_size):
    B, S, _ = x.shape
    H = hidden_size

    def cell(x_t, h, c, wih, whh, b):
        g = x_t @ wih + h @ whh + b
        i = jax.nn.sigmoid(g[:, :H]); f = jax.nn.sigmoid(g[:, H:2 * H])
        gg = jnp.tanh(g[:, 2 * H:3 * H]); o = jax.nn.sigmoid(g[:, 3 * H:])
        c = f * c + i * gg
        h = o * jnp.tanh(c)
        return h, c

    h0 = jnp.zeros((B, H)); c0 = jnp.zeros((B, H))
    h1 = jnp.zeros((B, H)); c1 = jnp.zeros((B, H))
    outs = []
    for t in range(S):
        h0, c0 = cell(x[:, t], h0, c0, p['wih0'], p['whh0'], p['b0'])
        h1, c1 = cell(h0, h1, c1, p['wih1'], p['whh1'], p['b1'])
        outs.append(h1)
    out = jnp.stack(outs, axis=1)                              # (B, S, H)
    heads = out @ p['whead'] + p['bhead']                      # (B, S, 4)
    sl = lambda a: a[:, -output_size:, :]
    return {
        'skew': sl(jnp.clip(heads[..., 0:1], -3.0, 3.0)),
        'loc': sl(heads[..., 1:2]),
        'tailweight': sl(0.001 + jnp.minimum(jax.nn.softplus(heads[..., 2:3]), 5.0)),
        'scale': sl(0.001 + jax.nn.softplus(heads[..., 3:4])),
    }


if __name__ == "__main__":
    # small shapes consistent with the module: batch=2, seq=8, input=16,
    # hidden=32, num_layers=2, output_size=4 (last 4 timesteps)
    B, S, I, H, OUT = 2, 8, 16, 32, 4

    key = jax.random.PRNGKey(0)
    kx, kp = jax.random.split(key)
    x = jax.random.normal(kx, (B, S, I), jnp.float32)
    params = init_params(kp, I, H)

    dist_params = normal_skew_forward(x, params, hidden_size=H, output_size=OUT)
    dist_params = jax.block_until_ready(dist_params)

    ref = ref_forward(x, params, hidden_size=H, output_size=OUT)
    # Tolerance accounts for bf16 MXU operands in the recurrent dots
    # (recurrent state / activations stay f32, so error does not compound).
    for k in ('skew', 'loc', 'tailweight', 'scale'):
        assert dist_params[k].shape == (B, OUT, 1), (k, dist_params[k].shape)
        assert jnp.allclose(dist_params[k], ref[k], atol=5e-3, rtol=5e-3), k

    print("KERNEL_OK")
</pallas_src>

<mosaic_0001>
module attributes {stable_mosaic.version = 11 : i64} {
  func.func @_normal_skew_kernel(%arg0: memref<64x16xf32, #tpu.memory_space<vmem>>, %arg1: memref<16x128xf32, #tpu.memory_space<vmem>>, %arg2: memref<32x128xbf16, #tpu.memory_space<vmem>>, %arg3: memref<1x128xf32, #tpu.memory_space<vmem>>, %arg4: memref<32x128xbf16, #tpu.memory_space<vmem>>, %arg5: memref<32x128xbf16, #tpu.memory_space<vmem>>, %arg6: memref<1x128xf32, #tpu.memory_space<vmem>>, %arg7: memref<32x4xf32, #tpu.memory_space<vmem>>, %arg8: memref<1x4xf32, #tpu.memory_space<vmem>>, %arg9: memref<32x4xf32, #tpu.memory_space<vmem>>, %arg10: memref<64x128xf32, #tpu.memory_space<vmem>>, %arg11: memref<32x32xf32, #tpu.memory_space<vmem>>) attributes {dimension_semantics = [], scalar_prefetch = 0 : i64, scratch_operands = 2 : i64, tpu.core_type = #tpu.core_type<tc>} {
    %c0 = arith.constant 0 : index
    %c0_0 = arith.constant 0 : index
    %0 = vector.load %arg2[%c0, %c0_0] : memref<32x128xbf16, #tpu.memory_space<vmem>>, vector<32x128xbf16>
    %c0_1 = arith.constant 0 : index
    %c0_2 = arith.constant 0 : index
    %1 = vector.load %arg4[%c0_1, %c0_2] : memref<32x128xbf16, #tpu.memory_space<vmem>>, vector<32x128xbf16>
    %c0_3 = arith.constant 0 : index
    %c0_4 = arith.constant 0 : index
    %2 = vector.load %arg5[%c0_3, %c0_4] : memref<32x128xbf16, #tpu.memory_space<vmem>>, vector<32x128xbf16>
    %c0_5 = arith.constant 0 : index
    %c0_6 = arith.constant 0 : index
    %3 = vector.load %arg0[%c0_5, %c0_6] : memref<64x16xf32, #tpu.memory_space<vmem>>, vector<64x16xf32>
    %c0_7 = arith.constant 0 : index
    %c0_8 = arith.constant 0 : index
    %4 = vector.load %arg1[%c0_7, %c0_8] : memref<16x128xf32, #tpu.memory_space<vmem>>, vector<16x128xf32>
    %cst = arith.constant dense<0.000000e+00> : vector<64x128xf32>
    %5 = tpu.matmul %3, %4, %cst {dimension_numbers = #tpu.dot_dimension_numbers<[1], [0], [0], [1], [0, 0, 1, 1], [], []>} : vector<64x16xf32>, vector<16x128xf32>, vector<64x128xf32> -> vector<64x128xf32>
    %c0_9 = arith.constant 0 : index
    %c0_10 = arith.constant 0 : index
    %6 = vector.load %arg3[%c0_9, %c0_10] : memref<1x128xf32, #tpu.memory_space<vmem>>, vector<1x128xf32>
    %7 = vector.broadcast %6 : vector<1x128xf32> to vector<64x128xf32>
    %8 = arith.addf %5, %7 : vector<64x128xf32>
    %c0_11 = arith.constant 0 : index
    %c0_12 = arith.constant 0 : index
    %9 = vector.load %arg10[%c0_11, %c0_12] : memref<64x128xf32, #tpu.memory_space<vmem>>, vector<64x128xf32>
    tpu.vector_store %arg10[%c0_11, %c0_12], %8 {strides = array<i32>} : memref<64x128xf32, #tpu.memory_space<vmem>>, vector<64x128xf32>,
    %c0_13 = arith.constant 0 : index
    %c0_14 = arith.constant 0 : index
    %10 = vector.load %arg6[%c0_13, %c0_14] : memref<1x128xf32, #tpu.memory_space<vmem>>, vector<1x128xf32>
    %11 = vector.shape_cast %10 : vector<1x128xf32> to vector<1x128xf32>
    %12 = vector.broadcast %11 : vector<1x128xf32> to vector<8x128xf32>
    %cst_15 = arith.constant 0.000000e+00 : f32
    %13 = vector.broadcast %cst_15 : f32 to vector<8x32xf32>
    %c0_i32 = arith.constant 0 : i32
    %c8_i32 = arith.constant 8 : i32
    %14 = arith.muli %c0_i32, %c8_i32 : i32
    %15 = tpu.assume_multiple %14, 8 : i32
    %16 = arith.index_cast %15 : i32 to index
    %c0_16 = arith.constant 0 : index
    %17 = vector.load %arg10[%16, %c0_16] : memref<64x128xf32, #tpu.memory_space<vmem>>, vector<8x128xf32>
    %18 = arith.truncf %13 : vector<8x32xf32> to vector<8x32xbf16>
    %cst_17 = arith.constant dense<0.000000e+00> : vector<8x128xf32>
    %19 = tpu.matmul %18, %0, %cst_17 {dimension_numbers = #tpu.dot_dimension_numbers<[1], [0], [0], [1], [0, 0, 1, 1], [], []>} : vector<8x32xbf16>, vector<32x128xbf16>, vector<8x128xf32> -> vector<8x128xf32>
    %20 = arith.addf %17, %19 : vector<8x128xf32>
    %21 = math.tanh %20 : vector<8x128xf32>
    %22 = vector.extract_strided_slice %21 {offsets = [0, 0], sizes = [8, 32], strides = [1, 1]} : vector<8x128xf32> to vector<8x32xf32>
    %23 = vector.extract_strided_slice %21 {offsets = [0, 32], sizes = [8, 32], strides = [1, 1]} : vector<8x128xf32> to vector<8x32xf32>
    %24 = vector.extract_strided_slice %21 {offsets = [0, 64], sizes = [8, 32], strides = [1, 1]} : vector<8x128xf32> to vector<8x32xf32>
    %25 = vector.extract_strided_slice %21 {offsets = [0, 96], sizes = [8, 32], strides = [1, 1]} : vector<8x128xf32> to vector<8x32xf32>
    %cst_18 = arith.constant 5.000000e-01 : f32
    %26 = vector.broadcast %cst_18 : f32 to vector<8x32xf32>
    %27 = arith.mulf %26, %23 : vector<8x32xf32>
    %cst_19 = arith.constant 5.000000e-01 : f32
    %28 = vector.broadcast %cst_19 : f32 to vector<8x32xf32>
    %29 = arith.addf %27, %28 : vector<8x32xf32>
    %30 = arith.mulf %29, %13 : vector<8x32xf32>
    %cst_20 = arith.constant 5.000000e-01 : f32
    %31 = vector.broadcast %cst_20 : f32 to vector<8x32xf32>
    %32 = arith.mulf %31, %22 : vector<8x32xf32>
    %cst_21 = arith.constant 5.000000e-01 : f32
    %33 = vector.broadcast %cst_21 : f32 to vector<8x32xf32>
    %34 = arith.addf %32, %33 : vector<8x32xf32>
    %35 = arith.mulf %34, %24 : vector<8x32xf32>
    %36 = arith.addf %30, %35 : vector<8x32xf32>
    %cst_22 = arith.constant 5.000000e-01 : f32
    %37 = vector.broadcast %cst_22 : f32 to vector<8x32xf32>
    %38 = arith.mulf %37, %25 : vector<8x32xf32>
    %cst_23 = arith.constant 5.000000e-01 : f32
    %39 = vector.broadcast %cst_23 : f32 to vector<8x32xf32>
    %40 = arith.addf %38, %39 : vector<8x32xf32>
    %41 = math.tanh %36 : vector<8x32xf32>
    %42 = arith.mulf %40, %41 : vector<8x32xf32>
    %43 = arith.truncf %13 : vector<8x32xf32> to vector<8x32xbf16>
    %cst_24 = arith.constant dense<0.000000e+00> : vector<8x128xf32>
    %44 = tpu.matmul %43, %2, %cst_24 {dimension_numbers = #tpu.dot_dimension_numbers<[1], [0], [0], [1], [0, 0, 1, 1], [], []>} : vector<8x32xbf16>, vector<32x128xbf16>, vector<8x128xf32> -> vector<8x128xf32>
    %45 = arith.truncf %42 : vector<8x32xf32> to vector<8x32xbf16>
    %cst_25 = arith.constant dense<0.000000e+00> : vector<8x128xf32>
    %46 = tpu.matmul %45, %1, %cst_25 {dimension_numbers = #tpu.dot_dimension_numbers<[1], [0], [0], [1], [0, 0, 1, 1], [], []>} : vector<8x32xbf16>, vector<32x128xbf16>, vector<8x128xf32> -> vector<8x128xf32>
    %47 = arith.addf %44, %46 : vector<8x128xf32>
    %48 = arith.addf %47, %12 : vector<8x128xf32>
    %49 = math.tanh %48 : vector<8x128xf32>
    %50 = vector.extract_strided_slice %49 {offsets = [0, 0], sizes = [8, 32], strides = [1, 1]} : vector<8x128xf32> to vector<8x32xf32>
    %51 = vector.extract_strided_slice %49 {offsets = [0, 32], sizes = [8, 32], strides = [1, 1]} : vector<8x128xf32> to vector<8x32xf32>
    %52 = vector.extract_strided_slice %49 {offsets = [0, 64], sizes = [8, 32], strides = [1, 1]} : vector<8x128xf32> to vector<8x32xf32>
    %53 = vector.extract_strided_slice %49 {offsets = [0, 96], sizes = [8, 32], strides = [1, 1]} : vector<8x128xf32> to vector<8x32xf32>
    %cst_26 = arith.constant 5.000000e-01 : f32
    %54 = vector.broadcast %cst_26 : f32 to vector<8x32xf32>
    %55 = arith.mulf %54, %51 : vector<8x32xf32>
    %cst_27 = arith.constant 5.000000e-01 : f32
    %56 = vector.broadcast %cst_27 : f32 to vector<8x32xf32>
    %57 = arith.addf %55, %56 : vector<8x32xf32>
    %58 = arith.mulf %57, %13 : vector<8x32xf32>
    %cst_28 = arith.constant 5.000000e-01 : f32
    %59 = vector.broadcast %cst_28 : f32 to vector<8x32xf32>
    %60 = arith.mulf %59, %50 : vector<8x32xf32>
    %cst_29 = arith.constant 5.000000e-01 : f32
    %61 = vector.broadcast %cst_29 : f32 to vector<8x32xf32>
    %62 = arith.addf %60, %61 : vector<8x32xf32>
    %63 = arith.mulf %62, %52 : vector<8x32xf32>
    %64 = arith.addf %58, %63 : vector<8x32xf32>
    %cst_30 = arith.constant 5.000000e-01 : f32
    %65 = vector.broadcast %cst_30 : f32 to vector<8x32xf32>
    %66 = arith.mulf %65, %53 : vector<8x32xf32>
    %cst_31 = arith.constant 5.000000e-01 : f32
    %67 = vector.broadcast %cst_31 : f32 to vector<8x32xf32>
    %68 = arith.addf %66, %67 : vector<8x32xf32>
    %69 = math.tanh %64 : vector<8x32xf32>
    %70 = arith.mulf %68, %69 : vector<8x32xf32>
    %c4_i32 = arith.constant 4 : i32
    %71 = arith.cmpi sge, %c0_i32, %c4_i32 : i32
    %72 = arith.extui %71 : i1 to i32
    %c0_i32_32 = arith.constant 0 : i32
    %73 = arith.cmpi ne, %72, %c0_i32_32 : i32
    scf.if %73 {
      %c4_i32_177 = arith.constant 4 : i32
      %501 = arith.subi %c0_i32, %c4_i32_177 : i32
      %c8_i32_178 = arith.constant 8 : i32
      %502 = arith.muli %501, %c8_i32_178 : i32
      %503 = tpu.assume_multiple %502, 8 : i32
      %504 = arith.index_cast %503 : i32 to index
      %c0_179 = arith.constant 0 : index
      %505 = vector.load %arg11[%504, %c0_179] : memref<32x32xf32, #tpu.memory_space<vmem>>, vector<8x32xf32>
      tpu.vector_store %arg11[%504, %c0_179], %70 {strides = array<i32>} : memref<32x32xf32, #tpu.memory_space<vmem>>, vector<8x32xf32>,
    } else {
    }
    %c1_i32 = arith.constant 1 : i32
    %c8_i32_33 = arith.constant 8 : i32
    %74 = arith.muli %c1_i32, %c8_i32_33 : i32
    %75 = tpu.assume_multiple %74, 8 : i32
    %76 = arith.index_cast %75 : i32 to index
    %c0_34 = arith.constant 0 : index
    %77 = vector.load %arg10[%76, %c0_34] : memref<64x128xf32, #tpu.memory_space<vmem>>, vector<8x128xf32>
    %78 = arith.truncf %42 : vector<8x32xf32> to vector<8x32xbf16>
    %cst_35 = arith.constant dense<0.000000e+00> : vector<8x128xf32>
    %79 = tpu.matmul %78, %0, %cst_35 {dimension_numbers = #tpu.dot_dimension_numbers<[1], [0], [0], [1], [0, 0, 1, 1], [], []>} : vector<8x32xbf16>, vector<32x128xbf16>, vector<8x128xf32> -> vector<8x128xf32>
    %80 = arith.addf %77, %79 : vector<8x128xf32>
    %81 = math.tanh %80 : vector<8x128xf32>
    %82 = vector.extract_strided_slice %81 {offsets = [0, 0], sizes = [8, 32], strides = [1, 1]} : vector<8x128xf32> to vector<8x32xf32>
    %83 = vector.extract_strided_slice %81 {offsets = [0, 32], sizes = [8, 32], strides = [1, 1]} : vector<8x128xf32> to vector<8x32xf32>
    %84 = vector.extract_strided_slice %81 {offsets = [0, 64], sizes = [8, 32], strides = [1, 1]} : vector<8x128xf32> to vector<8x32xf32>
    %85 = vector.extract_strided_slice %81 {offsets = [0, 96], sizes = [8, 32], strides = [1, 1]} : vector<8x128xf32> to vector<8x32xf32>
    %cst_36 = arith.constant 5.000000e-01 : f32
    %86 = vector.broadcast %cst_36 : f32 to vector<8x32xf32>
    %87 = arith.mulf %86, %83 : vector<8x32xf32>
    %cst_37 = arith.constant 5.000000e-01 : f32
    %88 = vector.broadcast %cst_37 : f32 to vector<8x32xf32>
    %89 = arith.addf %87, %88 : vector<8x32xf32>
    %90 = arith.mulf %89, %36 : vector<8x32xf32>
    %cst_38 = arith.constant 5.000000e-01 : f32
    %91 = vector.broadcast %cst_38 : f32 to vector<8x32xf32>
    %92 = arith.mulf %91, %82 : vector<8x32xf32>
    %cst_39 = arith.constant 5.000000e-01 : f32
    %93 = vector.broadcast %cst_39 : f32 to vector<8x32xf32>
    %94 = arith.addf %92, %93 : vector<8x32xf32>
    %95 = arith.mulf %94, %84 : vector<8x32xf32>
    %96 = arith.addf %90, %95 : vector<8x32xf32>
    %cst_40 = arith.constant 5.000000e-01 : f32
    %97 = vector.broadcast %cst_40 : f32 to vector<8x32xf32>
    %98 = arith.mulf %97, %85 : vector<8x32xf32>
    %cst_41 = arith.constant 5.000000e-01 : f32
    %99 = vector.broadcast %cst_41 : f32 to vector<8x32xf32>
    %100 = arith.addf %98, %99 : vector<8x32xf32>
    %101 = math.tanh %96 : vector<8x32xf32>
    %102 = arith.mulf %100, %101 : vector<8x32xf32>
    %103 = arith.truncf %70 : vector<8x32xf32> to vector<8x32xbf16>
    %cst_42 = arith.constant dense<0.000000e+00> : vector<8x128xf32>
    %104 = tpu.matmul %103, %2, %cst_42 {dimension_numbers = #tpu.dot_dimension_numbers<[1], [0], [0], [1], [0, 0, 1, 1], [], []>} : vector<8x32xbf16>, vector<32x128xbf16>, vector<8x128xf32> -> vector<8x128xf32>
    %105 = arith.truncf %102 : vector<8x32xf32> to vector<8x32xbf16>
    %cst_43 = arith.constant dense<0.000000e+00> : vector<8x128xf32>
    %106 = tpu.matmul %105, %1, %cst_43 {dimension_numbers = #tpu.dot_dimension_numbers<[1], [0], [0], [1], [0, 0, 1, 1], [], []>} : vector<8x32xbf16>, vector<32x128xbf16>, vector<8x128xf32> -> vector<8x128xf32>
    %107 = arith.addf %104, %106 : vector<8x128xf32>
    %108 = arith.addf %107, %12 : vector<8x128xf32>
    %109 = math.tanh %108 : vector<8x128xf32>
    %110 = vector.extract_strided_slice %109 {offsets = [0, 0], sizes = [8, 32], strides = [1, 1]} : vector<8x128xf32> to vector<8x32xf32>
    %111 = vector.extract_strided_slice %109 {offsets = [0, 32], sizes = [8, 32], strides = [1, 1]} : vector<8x128xf32> to vector<8x32xf32>
    %112 = vector.extract_strided_slice %109 {offsets = [0, 64], sizes = [8, 32], strides = [1, 1]} : vector<8x128xf32> to vector<8x32xf32>
    %113 = vector.extract_strided_slice %109 {offsets = [0, 96], sizes = [8, 32], strides = [1, 1]} : vector<8x128xf32> to vector<8x32xf32>
    %cst_44 = arith.constant 5.000000e-01 : f32
    %114 = vector.broadcast %cst_44 : f32 to vector<8x32xf32>
    %115 = arith.mulf %114, %111 : vector<8x32xf32>
    %cst_45 = arith.constant 5.000000e-01 : f32
    %116 = vector.broadcast %cst_45 : f32 to vector<8x32xf32>
    %117 = arith.addf %115, %116 : vector<8x32xf32>
    %118 = arith.mulf %117, %64 : vector<8x32xf32>
    %cst_46 = arith.constant 5.000000e-01 : f32
    %119 = vector.broadcast %cst_46 : f32 to vector<8x32xf32>
    %120 = arith.mulf %119, %110 : vector<8x32xf32>
    %cst_47 = arith.constant 5.000000e-01 : f32
    %121 = vector.broadcast %cst_47 : f32 to vector<8x32xf32>
    %122 = arith.addf %120, %121 : vector<8x32xf32>
    %123 = arith.mulf %122, %112 : vector<8x32xf32>
    %124 = arith.addf %118, %123 : vector<8x32xf32>
    %cst_48 = arith.constant 5.000000e-01 : f32
    %125 = vector.broadcast %cst_48 : f32 to vector<8x32xf32>
    %126 = arith.mulf %125, %113 : vector<8x32xf32>
    %cst_49 = arith.constant 5.000000e-01 : f32
    %127 = vector.broadcast %cst_49 : f32 to vector<8x32xf32>
    %128 = arith.addf %126, %127 : vector<8x32xf32>
    %129 = math.tanh %124 : vector<8x32xf32>
    %130 = arith.mulf %128, %129 : vector<8x32xf32>
    %c4_i32_50 = arith.constant 4 : i32
    %131 = arith.cmpi sge, %c1_i32, %c4_i32_50 : i32
    %132 = arith.extui %131 : i1 to i32
    %c0_i32_51 = arith.constant 0 : i32
    %133 = arith.cmpi ne, %132, %c0_i32_51 : i32
    scf.if %133 {
      %c4_i32_177 = arith.constant 4 : i32
      %501 = arith.subi %c1_i32, %c4_i32_177 : i32
      %c8_i32_178 = arith.constant 8 : i32
      %502 = arith.muli %501, %c8_i32_178 : i32
      %503 = tpu.assume_multiple %502, 8 : i32
      %504 = arith.index_cast %503 : i32 to index
      %c0_179 = arith.constant 0 : index
      %505 = vector.load %arg11[%504, %c0_179] : memref<32x32xf32, #tpu.memory_space<vmem>>, vector<8x32xf32>
      tpu.vector_store %arg11[%504, %c0_179], %130 {strides = array<i32>} : memref<32x32xf32, #tpu.memory_space<vmem>>, vector<8x32xf32>,
    } else {
    }
    %c2_i32 = arith.constant 2 : i32
    %c8_i32_52 = arith.constant 8 : i32
    %134 = arith.muli %c2_i32, %c8_i32_52 : i32
    %135 = tpu.assume_multiple %134, 8 : i32
    %136 = arith.index_cast %135 : i32 to index
    %c0_53 = arith.constant 0 : index
    %137 = vector.load %arg10[%136, %c0_53] : memref<64x128xf32, #tpu.memory_space<vmem>>, vector<8x128xf32>
    %138 = arith.truncf %102 : vector<8x32xf32> to vector<8x32xbf16>
    %cst_54 = arith.constant dense<0.000000e+00> : vector<8x128xf32>
    %139 = tpu.matmul %138, %0, %cst_54 {dimension_numbers = #tpu.dot_dimension_numbers<[1], [0], [0], [1], [0, 0, 1, 1], [], []>} : vector<8x32xbf16>, vector<32x128xbf16>, vector<8x128xf32> -> vector<8x128xf32>
    %140 = arith.addf %137, %139 : vector<8x128xf32>
    %141 = math.tanh %140 : vector<8x128xf32>
    %142 = vector.extract_strided_slice %141 {offsets = [0, 0], sizes = [8, 32], strides = [1, 1]} : vector<8x128xf32> to vector<8x32xf32>
    %143 = vector.extract_strided_slice %141 {offsets = [0, 32], sizes = [8, 32], strides = [1, 1]} : vector<8x128xf32> to vector<8x32xf32>
    %144 = vector.extract_strided_slice %141 {offsets = [0, 64], sizes = [8, 32], strides = [1, 1]} : vector<8x128xf32> to vector<8x32xf32>
    %145 = vector.extract_strided_slice %141 {offsets = [0, 96], sizes = [8, 32], strides = [1, 1]} : vector<8x128xf32> to vector<8x32xf32>
    %cst_55 = arith.constant 5.000000e-01 : f32
    %146 = vector.broadcast %cst_55 : f32 to vector<8x32xf32>
    %147 = arith.mulf %146, %143 : vector<8x32xf32>
    %cst_56 = arith.constant 5.000000e-01 : f32
    %148 = vector.broadcast %cst_56 : f32 to vector<8x32xf32>
    %149 = arith.addf %147, %148 : vector<8x32xf32>
    %150 = arith.mulf %149, %96 : vector<8x32xf32>
    %cst_57 = arith.constant 5.000000e-01 : f32
    %151 = vector.broadcast %cst_57 : f32 to vector<8x32xf32>
    %152 = arith.mulf %151, %142 : vector<8x32xf32>
    %cst_58 = arith.constant 5.000000e-01 : f32
    %153 = vector.broadcast %cst_58 : f32 to vector<8x32xf32>
    %154 = arith.addf %152, %153 : vector<8x32xf32>
    %155 = arith.mulf %154, %144 : vector<8x32xf32>
    %156 = arith.addf %150, %155 : vector<8x32xf32>
    %cst_59 = arith.constant 5.000000e-01 : f32
    %157 = vector.broadcast %cst_59 : f32 to vector<8x32xf32>
    %158 = arith.mulf %157, %145 : vector<8x32xf32>
    %cst_60 = arith.constant 5.000000e-01 : f32
    %159 = vector.broadcast %cst_60 : f32 to vector<8x32xf32>
    %160 = arith.addf %158, %159 : vector<8x32xf32>
    %161 = math.tanh %156 : vector<8x32xf32>
    %162 = arith.mulf %160, %161 : vector<8x32xf32>
    %163 = arith.truncf %130 : vector<8x32xf32> to vector<8x32xbf16>
    %cst_61 = arith.constant dense<0.000000e+00> : vector<8x128xf32>
    %164 = tpu.matmul %163, %2, %cst_61 {dimension_numbers = #tpu.dot_dimension_numbers<[1], [0], [0], [1], [0, 0, 1, 1], [], []>} : vector<8x32xbf16>, vector<32x128xbf16>, vector<8x128xf32> -> vector<8x128xf32>
    %165 = arith.truncf %162 : vector<8x32xf32> to vector<8x32xbf16>
    %cst_62 = arith.constant dense<0.000000e+00> : vector<8x128xf32>
    %166 = tpu.matmul %165, %1, %cst_62 {dimension_numbers = #tpu.dot_dimension_numbers<[1], [0], [0], [1], [0, 0, 1, 1], [], []>} : vector<8x32xbf16>, vector<32x128xbf16>, vector<8x128xf32> -> vector<8x128xf32>
    %167 = arith.addf %164, %166 : vector<8x128xf32>
    %168 = arith.addf %167, %12 : vector<8x128xf32>
    %169 = math.tanh %168 : vector<8x128xf32>
    %170 = vector.extract_strided_slice %169 {offsets = [0, 0], sizes = [8, 32], strides = [1, 1]} : vector<8x128xf32> to vector<8x32xf32>
    %171 = vector.extract_strided_slice %169 {offsets = [0, 32], sizes = [8, 32], strides = [1, 1]} : vector<8x128xf32> to vector<8x32xf32>
    %172 = vector.extract_strided_slice %169 {offsets = [0, 64], sizes = [8, 32], strides = [1, 1]} : vector<8x128xf32> to vector<8x32xf32>
    %173 = vector.extract_strided_slice %169 {offsets = [0, 96], sizes = [8, 32], strides = [1, 1]} : vector<8x128xf32> to vector<8x32xf32>
    %cst_63 = arith.constant 5.000000e-01 : f32
    %174 = vector.broadcast %cst_63 : f32 to vector<8x32xf32>
    %175 = arith.mulf %174, %171 : vector<8x32xf32>
    %cst_64 = arith.constant 5.000000e-01 : f32
    %176 = vector.broadcast %cst_64 : f32 to vector<8x32xf32>
    %177 = arith.addf %175, %176 : vector<8x32xf32>
    %178 = arith.mulf %177, %124 : vector<8x32xf32>
    %cst_65 = arith.constant 5.000000e-01 : f32
    %179 = vector.broadcast %cst_65 : f32 to vector<8x32xf32>
    %180 = arith.mulf %179, %170 : vector<8x32xf32>
    %cst_66 = arith.constant 5.000000e-01 : f32
    %181 = vector.broadcast %cst_66 : f32 to vector<8x32xf32>
    %182 = arith.addf %180, %181 : vector<8x32xf32>
    %183 = arith.mulf %182, %172 : vector<8x32xf32>
    %184 = arith.addf %178, %183 : vector<8x32xf32>
    %cst_67 = arith.constant 5.000000e-01 : f32
    %185 = vector.broadcast %cst_67 : f32 to vector<8x32xf32>
    %186 = arith.mulf %185, %173 : vector<8x32xf32>
    %cst_68 = arith.constant 5.000000e-01 : f32
    %187 = vector.broadcast %cst_68 : f32 to vector<8x32xf32>
    %188 = arith.addf %186, %187 : vector<8x32xf32>
    %189 = math.tanh %184 : vector<8x32xf32>
    %190 = arith.mulf %188, %189 : vector<8x32xf32>
    %c4_i32_69 = arith.constant 4 : i32
    %191 = arith.cmpi sge, %c2_i32, %c4_i32_69 : i32
    %192 = arith.extui %191 : i1 to i32
    %c0_i32_70 = arith.constant 0 : i32
    %193 = arith.cmpi ne, %192, %c0_i32_70 : i32
    scf.if %193 {
      %c4_i32_177 = arith.constant 4 : i32
      %501 = arith.subi %c2_i32, %c4_i32_177 : i32
      %c8_i32_178 = arith.constant 8 : i32
      %502 = arith.muli %501, %c8_i32_178 : i32
      %503 = tpu.assume_multiple %502, 8 : i32
      %504 = arith.index_cast %503 : i32 to index
      %c0_179 = arith.constant 0 : index
      %505 = vector.load %arg11[%504, %c0_179] : memref<32x32xf32, #tpu.memory_space<vmem>>, vector<8x32xf32>
      tpu.vector_store %arg11[%504, %c0_179], %190 {strides = array<i32>} : memref<32x32xf32, #tpu.memory_space<vmem>>, vector<8x32xf32>,
    } else {
    }
    %c3_i32 = arith.constant 3 : i32
    %c8_i32_71 = arith.constant 8 : i32
    %194 = arith.muli %c3_i32, %c8_i32_71 : i32
    %195 = tpu.assume_multiple %194, 8 : i32
    %196 = arith.index_cast %195 : i32 to index
    %c0_72 = arith.constant 0 : index
    %197 = vector.load %arg10[%196, %c0_72] : memref<64x128xf32, #tpu.memory_space<vmem>>, vector<8x128xf32>
    %198 = arith.truncf %162 : vector<8x32xf32> to vector<8x32xbf16>
    %cst_73 = arith.constant dense<0.000000e+00> : vector<8x128xf32>
    %199 = tpu.matmul %198, %0, %cst_73 {dimension_numbers = #tpu.dot_dimension_numbers<[1], [0], [0], [1], [0, 0, 1, 1], [], []>} : vector<8x32xbf16>, vector<32x128xbf16>, vector<8x128xf32> -> vector<8x128xf32>
    %200 = arith.addf %197, %199 : vector<8x128xf32>
    %201 = math.tanh %200 : vector<8x128xf32>
    %202 = vector.extract_strided_slice %201 {offsets = [0, 0], sizes = [8, 32], strides = [1, 1]} : vector<8x128xf32> to vector<8x32xf32>
    %203 = vector.extract_strided_slice %201 {offsets = [0, 32], sizes = [8, 32], strides = [1, 1]} : vector<8x128xf32> to vector<8x32xf32>
    %204 = vector.extract_strided_slice %201 {offsets = [0, 64], sizes = [8, 32], strides = [1, 1]} : vector<8x128xf32> to vector<8x32xf32>
    %205 = vector.extract_strided_slice %201 {offsets = [0, 96], sizes = [8, 32], strides = [1, 1]} : vector<8x128xf32> to vector<8x32xf32>
    %cst_74 = arith.constant 5.000000e-01 : f32
    %206 = vector.broadcast %cst_74 : f32 to vector<8x32xf32>
    %207 = arith.mulf %206, %203 : vector<8x32xf32>
    %cst_75 = arith.constant 5.000000e-01 : f32
    %208 = vector.broadcast %cst_75 : f32 to vector<8x32xf32>
    %209 = arith.addf %207, %208 : vector<8x32xf32>
    %210 = arith.mulf %209, %156 : vector<8x32xf32>
    %cst_76 = arith.constant 5.000000e-01 : f32
    %211 = vector.broadcast %cst_76 : f32 to vector<8x32xf32>
    %212 = arith.mulf %211, %202 : vector<8x32xf32>
    %cst_77 = arith.constant 5.000000e-01 : f32
    %213 = vector.broadcast %cst_77 : f32 to vector<8x32xf32>
    %214 = arith.addf %212, %213 : vector<8x32xf32>
    %215 = arith.mulf %214, %204 : vector<8x32xf32>
    %216 = arith.addf %210, %215 : vector<8x32xf32>
    %cst_78 = arith.constant 5.000000e-01 : f32
    %217 = vector.broadcast %cst_78 : f32 to vector<8x32xf32>
    %218 = arith.mulf %217, %205 : vector<8x32xf32>
    %cst_79 = arith.constant 5.000000e-01 : f32
    %219 = vector.broadcast %cst_79 : f32 to vector<8x32xf32>
    %220 = arith.addf %218, %219 : vector<8x32xf32>
    %221 = math.tanh %216 : vector<8x32xf32>
    %222 = arith.mulf %220, %221 : vector<8x32xf32>
    %223 = arith.truncf %190 : vector<8x32xf32> to vector<8x32xbf16>
    %cst_80 = arith.constant dense<0.000000e+00> : vector<8x128xf32>
    %224 = tpu.matmul %223, %2, %cst_80 {dimension_numbers = #tpu.dot_dimension_numbers<[1], [0], [0], [1], [0, 0, 1, 1], [], []>} : vector<8x32xbf16>, vector<32x128xbf16>, vector<8x128xf32> -> vector<8x128xf32>
    %225 = arith.truncf %222 : vector<8x32xf32> to vector<8x32xbf16>
    %cst_81 = arith.constant dense<0.000000e+00> : vector<8x128xf32>
    %226 = tpu.matmul %225, %1, %cst_81 {dimension_numbers = #tpu.dot_dimension_numbers<[1], [0], [0], [1], [0, 0, 1, 1], [], []>} : vector<8x32xbf16>, vector<32x128xbf16>, vector<8x128xf32> -> vector<8x128xf32>
    %227 = arith.addf %224, %226 : vector<8x128xf32>
    %228 = arith.addf %227, %12 : vector<8x128xf32>
    %229 = math.tanh %228 : vector<8x128xf32>
    %230 = vector.extract_strided_slice %229 {offsets = [0, 0], sizes = [8, 32], strides = [1, 1]} : vector<8x128xf32> to vector<8x32xf32>
    %231 = vector.extract_strided_slice %229 {offsets = [0, 32], sizes = [8, 32], strides = [1, 1]} : vector<8x128xf32> to vector<8x32xf32>
    %232 = vector.extract_strided_slice %229 {offsets = [0, 64], sizes = [8, 32], strides = [1, 1]} : vector<8x128xf32> to vector<8x32xf32>
    %233 = vector.extract_strided_slice %229 {offsets = [0, 96], sizes = [8, 32], strides = [1, 1]} : vector<8x128xf32> to vector<8x32xf32>
    %cst_82 = arith.constant 5.000000e-01 : f32
    %234 = vector.broadcast %cst_82 : f32 to vector<8x32xf32>
    %235 = arith.mulf %234, %231 : vector<8x32xf32>
    %cst_83 = arith.constant 5.000000e-01 : f32
    %236 = vector.broadcast %cst_83 : f32 to vector<8x32xf32>
    %237 = arith.addf %235, %236 : vector<8x32xf32>
    %238 = arith.mulf %237, %184 : vector<8x32xf32>
    %cst_84 = arith.constant 5.000000e-01 : f32
    %239 = vector.broadcast %cst_84 : f32 to vector<8x32xf32>
    %240 = arith.mulf %239, %230 : vector<8x32xf32>
    %cst_85 = arith.constant 5.000000e-01 : f32
    %241 = vector.broadcast %cst_85 : f32 to vector<8x32xf32>
    %242 = arith.addf %240, %241 : vector<8x32xf32>
    %243 = arith.mulf %242, %232 : vector<8x32xf32>
    %244 = arith.addf %238, %243 : vector<8x32xf32>
    %cst_86 = arith.constant 5.000000e-01 : f32
    %245 = vector.broadcast %cst_86 : f32 to vector<8x32xf32>
    %246 = arith.mulf %245, %233 : vector<8x32xf32>
    %cst_87 = arith.constant 5.000000e-01 : f32
    %247 = vector.broadcast %cst_87 : f32 to vector<8x32xf32>
    %248 = arith.addf %246, %247 : vector<8x32xf32>
    %249 = math.tanh %244 : vector<8x32xf32>
    %250 = arith.mulf %248, %249 : vector<8x32xf32>
    %c4_i32_88 = arith.constant 4 : i32
    %251 = arith.cmpi sge, %c3_i32, %c4_i32_88 : i32
    %252 = arith.extui %251 : i1 to i32
    %c0_i32_89 = arith.constant 0 : i32
    %253 = arith.cmpi ne, %252, %c0_i32_89 : i32
    scf.if %253 {
      %c4_i32_177 = arith.constant 4 : i32
      %501 = arith.subi %c3_i32, %c4_i32_177 : i32
      %c8_i32_178 = arith.constant 8 : i32
      %502 = arith.muli %501, %c8_i32_178 : i32
      %503 = tpu.assume_multiple %502, 8 : i32
      %504 = arith.index_cast %503 : i32 to index
      %c0_179 = arith.constant 0 : index
      %505 = vector.load %arg11[%504, %c0_179] : memref<32x32xf32, #tpu.memory_space<vmem>>, vector<8x32xf32>
      tpu.vector_store %arg11[%504, %c0_179], %250 {strides = array<i32>} : memref<32x32xf32, #tpu.memory_space<vmem>>, vector<8x32xf32>,
    } else {
    }
    %c4_i32_90 = arith.constant 4 : i32
    %c8_i32_91 = arith.constant 8 : i32
    %254 = arith.muli %c4_i32_90, %c8_i32_91 : i32
    %255 = tpu.assume_multiple %254, 8 : i32
    %256 = arith.index_cast %255 : i32 to index
    %c0_92 = arith.constant 0 : index
    %257 = vector.load %arg10[%256, %c0_92] : memref<64x128xf32, #tpu.memory_space<vmem>>, vector<8x128xf32>
    %258 = arith.truncf %222 : vector<8x32xf32> to vector<8x32xbf16>
    %cst_93 = arith.constant dense<0.000000e+00> : vector<8x128xf32>
    %259 = tpu.matmul %258, %0, %cst_93 {dimension_numbers = #tpu.dot_dimension_numbers<[1], [0], [0], [1], [0, 0, 1, 1], [], []>} : vector<8x32xbf16>, vector<32x128xbf16>, vector<8x128xf32> -> vector<8x128xf32>
    %260 = arith.addf %257, %259 : vector<8x128xf32>
    %261 = math.tanh %260 : vector<8x128xf32>
    %262 = vector.extract_strided_slice %261 {offsets = [0, 0], sizes = [8, 32], strides = [1, 1]} : vector<8x128xf32> to vector<8x32xf32>
    %263 = vector.extract_strided_slice %261 {offsets = [0, 32], sizes = [8, 32], strides = [1, 1]} : vector<8x128xf32> to vector<8x32xf32>
    %264 = vector.extract_strided_slice %261 {offsets = [0, 64], sizes = [8, 32], strides = [1, 1]} : vector<8x128xf32> to vector<8x32xf32>
    %265 = vector.extract_strided_slice %261 {offsets = [0, 96], sizes = [8, 32], strides = [1, 1]} : vector<8x128xf32> to vector<8x32xf32>
    %cst_94 = arith.constant 5.000000e-01 : f32
    %266 = vector.broadcast %cst_94 : f32 to vector<8x32xf32>
    %267 = arith.mulf %266, %263 : vector<8x32xf32>
    %cst_95 = arith.constant 5.000000e-01 : f32
    %268 = vector.broadcast %cst_95 : f32 to vector<8x32xf32>
    %269 = arith.addf %267, %268 : vector<8x32xf32>
    %270 = arith.mulf %269, %216 : vector<8x32xf32>
    %cst_96 = arith.constant 5.000000e-01 : f32
    %271 = vector.broadcast %cst_96 : f32 to vector<8x32xf32>
    %272 = arith.mulf %271, %262 : vector<8x32xf32>
    %cst_97 = arith.constant 5.000000e-01 : f32
    %273 = vector.broadcast %cst_97 : f32 to vector<8x32xf32>
    %274 = arith.addf %272, %273 : vector<8x32xf32>
    %275 = arith.mulf %274, %264 : vector<8x32xf32>
    %276 = arith.addf %270, %275 : vector<8x32xf32>
    %cst_98 = arith.constant 5.000000e-01 : f32
    %277 = vector.broadcast %cst_98 : f32 to vector<8x32xf32>
    %278 = arith.mulf %277, %265 : vector<8x32xf32>
    %cst_99 = arith.constant 5.000000e-01 : f32
    %279 = vector.broadcast %cst_99 : f32 to vector<8x32xf32>
    %280 = arith.addf %278, %279 : vector<8x32xf32>
    %281 = math.tanh %276 : vector<8x32xf32>
    %282 = arith.mulf %280, %281 : vector<8x32xf32>
    %283 = arith.truncf %250 : vector<8x32xf32> to vector<8x32xbf16>
    %cst_100 = arith.constant dense<0.000000e+00> : vector<8x128xf32>
    %284 = tpu.matmul %283, %2, %cst_100 {dimension_numbers = #tpu.dot_dimension_numbers<[1], [0], [0], [1], [0, 0, 1, 1], [], []>} : vector<8x32xbf16>, vector<32x128xbf16>, vector<8x128xf32> -> vector<8x128xf32>
    %285 = arith.truncf %282 : vector<8x32xf32> to vector<8x32xbf16>
    %cst_101 = arith.constant dense<0.000000e+00> : vector<8x128xf32>
    %286 = tpu.matmul %285, %1, %cst_101 {dimension_numbers = #tpu.dot_dimension_numbers<[1], [0], [0], [1], [0, 0, 1, 1], [], []>} : vector<8x32xbf16>, vector<32x128xbf16>, vector<8x128xf32> -> vector<8x128xf32>
    %287 = arith.addf %284, %286 : vector<8x128xf32>
    %288 = arith.addf %287, %12 : vector<8x128xf32>
    %289 = math.tanh %288 : vector<8x128xf32>
    %290 = vector.extract_strided_slice %289 {offsets = [0, 0], sizes = [8, 32], strides = [1, 1]} : vector<8x128xf32> to vector<8x32xf32>
    %291 = vector.extract_strided_slice %289 {offsets = [0, 32], sizes = [8, 32], strides = [1, 1]} : vector<8x128xf32> to vector<8x32xf32>
    %292 = vector.extract_strided_slice %289 {offsets = [0, 64], sizes = [8, 32], strides = [1, 1]} : vector<8x128xf32> to vector<8x32xf32>
    %293 = vector.extract_strided_slice %289 {offsets = [0, 96], sizes = [8, 32], strides = [1, 1]} : vector<8x128xf32> to vector<8x32xf32>
    %cst_102 = arith.constant 5.000000e-01 : f32
    %294 = vector.broadcast %cst_102 : f32 to vector<8x32xf32>
    %295 = arith.mulf %294, %291 : vector<8x32xf32>
    %cst_103 = arith.constant 5.000000e-01 : f32
    %296 = vector.broadcast %cst_103 : f32 to vector<8x32xf32>
    %297 = arith.addf %295, %296 : vector<8x32xf32>
    %298 = arith.mulf %297, %244 : vector<8x32xf32>
    %cst_104 = arith.constant 5.000000e-01 : f32
    %299 = vector.broadcast %cst_104 : f32 to vector<8x32xf32>
    %300 = arith.mulf %299, %290 : vector<8x32xf32>
    %cst_105 = arith.constant 5.000000e-01 : f32
    %301 = vector.broadcast %cst_105 : f32 to vector<8x32xf32>
    %302 = arith.addf %300, %301 : vector<8x32xf32>
    %303 = arith.mulf %302, %292 : vector<8x32xf32>
    %304 = arith.addf %298, %303 : vector<8x32xf32>
    %cst_106 = arith.constant 5.000000e-01 : f32
    %305 = vector.broadcast %cst_106 : f32 to vector<8x32xf32>
    %306 = arith.mulf %305, %293 : vector<8x32xf32>
    %cst_107 = arith.constant 5.000000e-01 : f32
    %307 = vector.broadcast %cst_107 : f32 to vector<8x32xf32>
    %308 = arith.addf %306, %307 : vector<8x32xf32>
    %309 = math.tanh %304 : vector<8x32xf32>
    %310 = arith.mulf %308, %309 : vector<8x32xf32>
    %c4_i32_108 = arith.constant 4 : i32
    %311 = arith.cmpi sge, %c4_i32_90, %c4_i32_108 : i32
    %312 = arith.extui %311 : i1 to i32
    %c0_i32_109 = arith.constant 0 : i32
    %313 = arith.cmpi ne, %312, %c0_i32_109 : i32
    scf.if %313 {
      %c4_i32_177 = arith.constant 4 : i32
      %501 = arith.subi %c4_i32_90, %c4_i32_177 : i32
      %c8_i32_178 = arith.constant 8 : i32
      %502 = arith.muli %501, %c8_i32_178 : i32
      %503 = tpu.assume_multiple %502, 8 : i32
      %504 = arith.index_cast %503 : i32 to index
      %c0_179 = arith.constant 0 : index
      %505 = vector.load %arg11[%504, %c0_179] : memref<32x32xf32, #tpu.memory_space<vmem>>, vector<8x32xf32>
      tpu.vector_store %arg11[%504, %c0_179], %310 {strides = array<i32>} : memref<32x32xf32, #tpu.memory_space<vmem>>, vector<8x32xf32>,
    } else {
    }
    %c5_i32 = arith.constant 5 : i32
    %c8_i32_110 = arith.constant 8 : i32
    %314 = arith.muli %c5_i32, %c8_i32_110 : i32
    %315 = tpu.assume_multiple %314, 8 : i32
    %316 = arith.index_cast %315 : i32 to index
    %c0_111 = arith.constant 0 : index
    %317 = vector.load %arg10[%316, %c0_111] : memref<64x128xf32, #tpu.memory_space<vmem>>, vector<8x128xf32>
    %318 = arith.truncf %282 : vector<8x32xf32> to vector<8x32xbf16>
    %cst_112 = arith.constant dense<0.000000e+00> : vector<8x128xf32>
    %319 = tpu.matmul %318, %0, %cst_112 {dimension_numbers = #tpu.dot_dimension_numbers<[1], [0], [0], [1], [0, 0, 1, 1], [], []>} : vector<8x32xbf16>, vector<32x128xbf16>, vector<8x128xf32> -> vector<8x128xf32>
    %320 = arith.addf %317, %319 : vector<8x128xf32>
    %321 = math.tanh %320 : vector<8x128xf32>
    %322 = vector.extract_strided_slice %321 {offsets = [0, 0], sizes = [8, 32], strides = [1, 1]} : vector<8x128xf32> to vector<8x32xf32>
    %323 = vector.extract_strided_slice %321 {offsets = [0, 32], sizes = [8, 32], strides = [1, 1]} : vector<8x128xf32> to vector<8x32xf32>
    %324 = vector.extract_strided_slice %321 {offsets = [0, 64], sizes = [8, 32], strides = [1, 1]} : vector<8x128xf32> to vector<8x32xf32>
    %325 = vector.extract_strided_slice %321 {offsets = [0, 96], sizes = [8, 32], strides = [1, 1]} : vector<8x128xf32> to vector<8x32xf32>
    %cst_113 = arith.constant 5.000000e-01 : f32
    %326 = vector.broadcast %cst_113 : f32 to vector<8x32xf32>
    %327 = arith.mulf %326, %323 : vector<8x32xf32>
    %cst_114 = arith.constant 5.000000e-01 : f32
    %328 = vector.broadcast %cst_114 : f32 to vector<8x32xf32>
    %329 = arith.addf %327, %328 : vector<8x32xf32>
    %330 = arith.mulf %329, %276 : vector<8x32xf32>
    %cst_115 = arith.constant 5.000000e-01 : f32
    %331 = vector.broadcast %cst_115 : f32 to vector<8x32xf32>
    %332 = arith.mulf %331, %322 : vector<8x32xf32>
    %cst_116 = arith.constant 5.000000e-01 : f32
    %333 = vector.broadcast %cst_116 : f32 to vector<8x32xf32>
    %334 = arith.addf %332, %333 : vector<8x32xf32>
    %335 = arith.mulf %334, %324 : vector<8x32xf32>
    %336 = arith.addf %330, %335 : vector<8x32xf32>
    %cst_117 = arith.constant 5.000000e-01 : f32
    %337 = vector.broadcast %cst_117 : f32 to vector<8x32xf32>
    %338 = arith.mulf %337, %325 : vector<8x32xf32>
    %cst_118 = arith.constant 5.000000e-01 : f32
    %339 = vector.broadcast %cst_118 : f32 to vector<8x32xf32>
    %340 = arith.addf %338, %339 : vector<8x32xf32>
    %341 = math.tanh %336 : vector<8x32xf32>
    %342 = arith.mulf %340, %341 : vector<8x32xf32>
    %343 = arith.truncf %310 : vector<8x32xf32> to vector<8x32xbf16>
    %cst_119 = arith.constant dense<0.000000e+00> : vector<8x128xf32>
    %344 = tpu.matmul %343, %2, %cst_119 {dimension_numbers = #tpu.dot_dimension_numbers<[1], [0], [0], [1], [0, 0, 1, 1], [], []>} : vector<8x32xbf16>, vector<32x128xbf16>, vector<8x128xf32> -> vector<8x128xf32>
    %345 = arith.truncf %342 : vector<8x32xf32> to vector<8x32xbf16>
    %cst_120 = arith.constant dense<0.000000e+00> : vector<8x128xf32>
    %346 = tpu.matmul %345, %1, %cst_120 {dimension_numbers = #tpu.dot_dimension_numbers<[1], [0], [0], [1], [0, 0, 1, 1], [], []>} : vector<8x32xbf16>, vector<32x128xbf16>, vector<8x128xf32> -> vector<8x128xf32>
    %347 = arith.addf %344, %346 : vector<8x128xf32>
    %348 = arith.addf %347, %12 : vector<8x128xf32>
    %349 = math.tanh %348 : vector<8x128xf32>
    %350 = vector.extract_strided_slice %349 {offsets = [0, 0], sizes = [8, 32], strides = [1, 1]} : vector<8x128xf32> to vector<8x32xf32>
    %351 = vector.extract_strided_slice %349 {offsets = [0, 32], sizes = [8, 32], strides = [1, 1]} : vector<8x128xf32> to vector<8x32xf32>
    %352 = vector.extract_strided_slice %349 {offsets = [0, 64], sizes = [8, 32], strides = [1, 1]} : vector<8x128xf32> to vector<8x32xf32>
    %353 = vector.extract_strided_slice %349 {offsets = [0, 96], sizes = [8, 32], strides = [1, 1]} : vector<8x128xf32> to vector<8x32xf32>
    %cst_121 = arith.constant 5.000000e-01 : f32
    %354 = vector.broadcast %cst_121 : f32 to vector<8x32xf32>
    %355 = arith.mulf %354, %351 : vector<8x32xf32>
    %cst_122 = arith.constant 5.000000e-01 : f32
    %356 = vector.broadcast %cst_122 : f32 to vector<8x32xf32>
    %357 = arith.addf %355, %356 : vector<8x32xf32>
    %358 = arith.mulf %357, %304 : vector<8x32xf32>
    %cst_123 = arith.constant 5.000000e-01 : f32
    %359 = vector.broadcast %cst_123 : f32 to vector<8x32xf32>
    %360 = arith.mulf %359, %350 : vector<8x32xf32>
    %cst_124 = arith.constant 5.000000e-01 : f32
    %361 = vector.broadcast %cst_124 : f32 to vector<8x32xf32>
    %362 = arith.addf %360, %361 : vector<8x32xf32>
    %363 = arith.mulf %362, %352 : vector<8x32xf32>
    %364 = arith.addf %358, %363 : vector<8x32xf32>
    %cst_125 = arith.constant 5.000000e-01 : f32
    %365 = vector.broadcast %cst_125 : f32 to vector<8x32xf32>
    %366 = arith.mulf %365, %353 : vector<8x32xf32>
    %cst_126 = arith.constant 5.000000e-01 : f32
    %367 = vector.broadcast %cst_126 : f32 to vector<8x32xf32>
    %368 = arith.addf %366, %367 : vector<8x32xf32>
    %369 = math.tanh %364 : vector<8x32xf32>
    %370 = arith.mulf %368, %369 : vector<8x32xf32>
    %c4_i32_127 = arith.constant 4 : i32
    %371 = arith.cmpi sge, %c5_i32, %c4_i32_127 : i32
    %372 = arith.extui %371 : i1 to i32
    %c0_i32_128 = arith.constant 0 : i32
    %373 = arith.cmpi ne, %372, %c0_i32_128 : i32
    scf.if %373 {
      %c4_i32_177 = arith.constant 4 : i32
      %501 = arith.subi %c5_i32, %c4_i32_177 : i32
      %c8_i32_178 = arith.constant 8 : i32
      %502 = arith.muli %501, %c8_i32_178 : i32
      %503 = tpu.assume_multiple %502, 8 : i32
      %504 = arith.index_cast %503 : i32 to index
      %c0_179 = arith.constant 0 : index
      %505 = vector.load %arg11[%504, %c0_179] : memref<32x32xf32, #tpu.memory_space<vmem>>, vector<8x32xf32>
      tpu.vector_store %arg11[%504, %c0_179], %370 {strides = array<i32>} : memref<32x32xf32, #tpu.memory_space<vmem>>, vector<8x32xf32>,
    } else {
    }
    %c6_i32 = arith.constant 6 : i32
    %c8_i32_129 = arith.constant 8 : i32
    %374 = arith.muli %c6_i32, %c8_i32_129 : i32
    %375 = tpu.assume_multiple %374, 8 : i32
    %376 = arith.index_cast %375 : i32 to index
    %c0_130 = arith.constant 0 : index
    %377 = vector.load %arg10[%376, %c0_130] : memref<64x128xf32, #tpu.memory_space<vmem>>, vector<8x128xf32>
    %378 = arith.truncf %342 : vector<8x32xf32> to vector<8x32xbf16>
    %cst_131 = arith.constant dense<0.000000e+00> : vector<8x128xf32>
    %379 = tpu.matmul %378, %0, %cst_131 {dimension_numbers = #tpu.dot_dimension_numbers<[1], [0], [0], [1], [0, 0, 1, 1], [], []>} : vector<8x32xbf16>, vector<32x128xbf16>, vector<8x128xf32> -> vector<8x128xf32>
    %380 = arith.addf %377, %379 : vector<8x128xf32>
    %381 = math.tanh %380 : vector<8x128xf32>
    %382 = vector.extract_strided_slice %381 {offsets = [0, 0], sizes = [8, 32], strides = [1, 1]} : vector<8x128xf32> to vector<8x32xf32>
    %383 = vector.extract_strided_slice %381 {offsets = [0, 32], sizes = [8, 32], strides = [1, 1]} : vector<8x128xf32> to vector<8x32xf32>
    %384 = vector.extract_strided_slice %381 {offsets = [0, 64], sizes = [8, 32], strides = [1, 1]} : vector<8x128xf32> to vector<8x32xf32>
    %385 = vector.extract_strided_slice %381 {offsets = [0, 96], sizes = [8, 32], strides = [1, 1]} : vector<8x128xf32> to vector<8x32xf32>
    %cst_132 = arith.constant 5.000000e-01 : f32
    %386 = vector.broadcast %cst_132 : f32 to vector<8x32xf32>
    %387 = arith.mulf %386, %383 : vector<8x32xf32>
    %cst_133 = arith.constant 5.000000e-01 : f32
    %388 = vector.broadcast %cst_133 : f32 to vector<8x32xf32>
    %389 = arith.addf %387, %388 : vector<8x32xf32>
    %390 = arith.mulf %389, %336 : vector<8x32xf32>
    %cst_134 = arith.constant 5.000000e-01 : f32
    %391 = vector.broadcast %cst_134 : f32 to vector<8x32xf32>
    %392 = arith.mulf %391, %382 : vector<8x32xf32>
    %cst_135 = arith.constant 5.000000e-01 : f32
    %393 = vector.broadcast %cst_135 : f32 to vector<8x32xf32>
    %394 = arith.addf %392, %393 : vector<8x32xf32>
    %395 = arith.mulf %394, %384 : vector<8x32xf32>
    %396 = arith.addf %390, %395 : vector<8x32xf32>
    %cst_136 = arith.constant 5.000000e-01 : f32
    %397 = vector.broadcast %cst_136 : f32 to vector<8x32xf32>
    %398 = arith.mulf %397, %385 : vector<8x32xf32>
    %cst_137 = arith.constant 5.000000e-01 : f32
    %399 = vector.broadcast %cst_137 : f32 to vector<8x32xf32>
    %400 = arith.addf %398, %399 : vector<8x32xf32>
    %401 = math.tanh %396 : vector<8x32xf32>
    %402 = arith.mulf %400, %401 : vector<8x32xf32>
    %403 = arith.truncf %370 : vector<8x32xf32> to vector<8x32xbf16>
    %cst_138 = arith.constant dense<0.000000e+00> : vector<8x128xf32>
    %404 = tpu.matmul %403, %2, %cst_138 {dimension_numbers = #tpu.dot_dimension_numbers<[1], [0], [0], [1], [0, 0, 1, 1], [], []>} : vector<8x32xbf16>, vector<32x128xbf16>, vector<8x128xf32> -> vector<8x128xf32>
    %405 = arith.truncf %402 : vector<8x32xf32> to vector<8x32xbf16>
    %cst_139 = arith.constant dense<0.000000e+00> : vector<8x128xf32>
    %406 = tpu.matmul %405, %1, %cst_139 {dimension_numbers = #tpu.dot_dimension_numbers<[1], [0], [0], [1], [0, 0, 1, 1], [], []>} : vector<8x32xbf16>, vector<32x128xbf16>, vector<8x128xf32> -> vector<8x128xf32>
    %407 = arith.addf %404, %406 : vector<8x128xf32>
    %408 = arith.addf %407, %12 : vector<8x128xf32>
    %409 = math.tanh %408 : vector<8x128xf32>
    %410 = vector.extract_strided_slice %409 {offsets = [0, 0], sizes = [8, 32], strides = [1, 1]} : vector<8x128xf32> to vector<8x32xf32>
    %411 = vector.extract_strided_slice %409 {offsets = [0, 32], sizes = [8, 32], strides = [1, 1]} : vector<8x128xf32> to vector<8x32xf32>
    %412 = vector.extract_strided_slice %409 {offsets = [0, 64], sizes = [8, 32], strides = [1, 1]} : vector<8x128xf32> to vector<8x32xf32>
    %413 = vector.extract_strided_slice %409 {offsets = [0, 96], sizes = [8, 32], strides = [1, 1]} : vector<8x128xf32> to vector<8x32xf32>
    %cst_140 = arith.constant 5.000000e-01 : f32
    %414 = vector.broadcast %cst_140 : f32 to vector<8x32xf32>
    %415 = arith.mulf %414, %411 : vector<8x32xf32>
    %cst_141 = arith.constant 5.000000e-01 : f32
    %416 = vector.broadcast %cst_141 : f32 to vector<8x32xf32>
    %417 = arith.addf %415, %416 : vector<8x32xf32>
    %418 = arith.mulf %417, %364 : vector<8x32xf32>
    %cst_142 = arith.constant 5.000000e-01 : f32
    %419 = vector.broadcast %cst_142 : f32 to vector<8x32xf32>
    %420 = arith.mulf %419, %410 : vector<8x32xf32>
    %cst_143 = arith.constant 5.000000e-01 : f32
    %421 = vector.broadcast %cst_143 : f32 to vector<8x32xf32>
    %422 = arith.addf %420, %421 : vector<8x32xf32>
    %423 = arith.mulf %422, %412 : vector<8x32xf32>
    %424 = arith.addf %418, %423 : vector<8x32xf32>
    %cst_144 = arith.constant 5.000000e-01 : f32
    %425 = vector.broadcast %cst_144 : f32 to vector<8x32xf32>
    %426 = arith.mulf %425, %413 : vector<8x32xf32>
    %cst_145 = arith.constant 5.000000e-01 : f32
    %427 = vector.broadcast %cst_145 : f32 to vector<8x32xf32>
    %428 = arith.addf %426, %427 : vector<8x32xf32>
    %429 = math.tanh %424 : vector<8x32xf32>
    %430 = arith.mulf %428, %429 : vector<8x32xf32>
    %c4_i32_146 = arith.constant 4 : i32
    %431 = arith.cmpi sge, %c6_i32, %c4_i32_146 : i32
    %432 = arith.extui %431 : i1 to i32
    %c0_i32_147 = arith.constant 0 : i32
    %433 = arith.cmpi ne, %432, %c0_i32_147 : i32
    scf.if %433 {
      %c4_i32_177 = arith.constant 4 : i32
      %501 = arith.subi %c6_i32, %c4_i32_177 : i32
      %c8_i32_178 = arith.constant 8 : i32
      %502 = arith.muli %501, %c8_i32_178 : i32
      %503 = tpu.assume_multiple %502, 8 : i32
      %504 = arith.index_cast %503 : i32 to index
      %c0_179 = arith.constant 0 : index
      %505 = vector.load %arg11[%504, %c0_179] : memref<32x32xf32, #tpu.memory_space<vmem>>, vector<8x32xf32>
      tpu.vector_store %arg11[%504, %c0_179], %430 {strides = array<i32>} : memref<32x32xf32, #tpu.memory_space<vmem>>, vector<8x32xf32>,
    } else {
    }
    %c7_i32 = arith.constant 7 : i32
    %c8_i32_148 = arith.constant 8 : i32
    %434 = arith.muli %c7_i32, %c8_i32_148 : i32
    %435 = tpu.assume_multiple %434, 8 : i32
    %436 = arith.index_cast %435 : i32 to index
    %c0_149 = arith.constant 0 : index
    %437 = vector.load %arg10[%436, %c0_149] : memref<64x128xf32, #tpu.memory_space<vmem>>, vector<8x128xf32>
    %438 = arith.truncf %402 : vector<8x32xf32> to vector<8x32xbf16>
    %cst_150 = arith.constant dense<0.000000e+00> : vector<8x128xf32>
    %439 = tpu.matmul %438, %0, %cst_150 {dimension_numbers = #tpu.dot_dimension_numbers<[1], [0], [0], [1], [0, 0, 1, 1], [], []>} : vector<8x32xbf16>, vector<32x128xbf16>, vector<8x128xf32> -> vector<8x128xf32>
    %440 = arith.addf %437, %439 : vector<8x128xf32>
    %441 = math.tanh %440 : vector<8x128xf32>
    %442 = vector.extract_strided_slice %441 {offsets = [0, 0], sizes = [8, 32], strides = [1, 1]} : vector<8x128xf32> to vector<8x32xf32>
    %443 = vector.extract_strided_slice %441 {offsets = [0, 32], sizes = [8, 32], strides = [1, 1]} : vector<8x128xf32> to vector<8x32xf32>
    %444 = vector.extract_strided_slice %441 {offsets = [0, 64], sizes = [8, 32], strides = [1, 1]} : vector<8x128xf32> to vector<8x32xf32>
    %445 = vector.extract_strided_slice %441 {offsets = [0, 96], sizes = [8, 32], strides = [1, 1]} : vector<8x128xf32> to vector<8x32xf32>
    %cst_151 = arith.constant 5.000000e-01 : f32
    %446 = vector.broadcast %cst_151 : f32 to vector<8x32xf32>
    %447 = arith.mulf %446, %443 : vector<8x32xf32>
    %cst_152 = arith.constant 5.000000e-01 : f32
    %448 = vector.broadcast %cst_152 : f32 to vector<8x32xf32>
    %449 = arith.addf %447, %448 : vector<8x32xf32>
    %450 = arith.mulf %449, %396 : vector<8x32xf32>
    %cst_153 = arith.constant 5.000000e-01 : f32
    %451 = vector.broadcast %cst_153 : f32 to vector<8x32xf32>
    %452 = arith.mulf %451, %442 : vector<8x32xf32>
    %cst_154 = arith.constant 5.000000e-01 : f32
    %453 = vector.broadcast %cst_154 : f32 to vector<8x32xf32>
    %454 = arith.addf %452, %453 : vector<8x32xf32>
    %455 = arith.mulf %454, %444 : vector<8x32xf32>
    %456 = arith.addf %450, %455 : vector<8x32xf32>
    %cst_155 = arith.constant 5.000000e-01 : f32
    %457 = vector.broadcast %cst_155 : f32 to vector<8x32xf32>
    %458 = arith.mulf %457, %445 : vector<8x32xf32>
    %cst_156 = arith.constant 5.000000e-01 : f32
    %459 = vector.broadcast %cst_156 : f32 to vector<8x32xf32>
    %460 = arith.addf %458, %459 : vector<8x32xf32>
    %461 = math.tanh %456 : vector<8x32xf32>
    %462 = arith.mulf %460, %461 : vector<8x32xf32>
    %463 = arith.truncf %430 : vector<8x32xf32> to vector<8x32xbf16>
    %cst_157 = arith.constant dense<0.000000e+00> : vector<8x128xf32>
    %464 = tpu.matmul %463, %2, %cst_157 {dimension_numbers = #tpu.dot_dimension_numbers<[1], [0], [0], [1], [0, 0, 1, 1], [], []>} : vector<8x32xbf16>, vector<32x128xbf16>, vector<8x128xf32> -> vector<8x128xf32>
    %465 = arith.truncf %462 : vector<8x32xf32> to vector<8x32xbf16>
    %cst_158 = arith.constant dense<0.000000e+00> : vector<8x128xf32>
    %466 = tpu.matmul %465, %1, %cst_158 {dimension_numbers = #tpu.dot_dimension_numbers<[1], [0], [0], [1], [0, 0, 1, 1], [], []>} : vector<8x32xbf16>, vector<32x128xbf16>, vector<8x128xf32> -> vector<8x128xf32>
    %467 = arith.addf %464, %466 : vector<8x128xf32>
    %468 = arith.addf %467, %12 : vector<8x128xf32>
    %469 = math.tanh %468 : vector<8x128xf32>
    %470 = vector.extract_strided_slice %469 {offsets = [0, 0], sizes = [8, 32], strides = [1, 1]} : vector<8x128xf32> to vector<8x32xf32>
    %471 = vector.extract_strided_slice %469 {offsets = [0, 32], sizes = [8, 32], strides = [1, 1]} : vector<8x128xf32> to vector<8x32xf32>
    %472 = vector.extract_strided_slice %469 {offsets = [0, 64], sizes = [8, 32], strides = [1, 1]} : vector<8x128xf32> to vector<8x32xf32>
    %473 = vector.extract_strided_slice %469 {offsets = [0, 96], sizes = [8, 32], strides = [1, 1]} : vector<8x128xf32> to vector<8x32xf32>
    %cst_159 = arith.constant 5.000000e-01 : f32
    %474 = vector.broadcast %cst_159 : f32 to vector<8x32xf32>
    %475 = arith.mulf %474, %471 : vector<8x32xf32>
    %cst_160 = arith.constant 5.000000e-01 : f32
    %476 = vector.broadcast %cst_160 : f32 to vector<8x32xf32>
    %477 = arith.addf %475, %476 : vector<8x32xf32>
    %478 = arith.mulf %477, %424 : vector<8x32xf32>
    %cst_161 = arith.constant 5.000000e-01 : f32
    %479 = vector.broadcast %cst_161 : f32 to vector<8x32xf32>
    %480 = arith.mulf %479, %470 : vector<8x32xf32>
    %cst_162 = arith.constant 5.000000e-01 : f32
    %481 = vector.broadcast %cst_162 : f32 to vector<8x32xf32>
    %482 = arith.addf %480, %481 : vector<8x32xf32>
    %483 = arith.mulf %482, %472 : vector<8x32xf32>
    %484 = arith.addf %478, %483 : vector<8x32xf32>
    %cst_163 = arith.constant 5.000000e-01 : f32
    %485 = vector.broadcast %cst_163 : f32 to vector<8x32xf32>
    %486 = arith.mulf %485, %473 : vector<8x32xf32>
    %cst_164 = arith.constant 5.000000e-01 : f32
    %487 = vector.broadcast %cst_164 : f32 to vector<8x32xf32>
    %488 = arith.addf %486, %487 : vector<8x32xf32>
    %489 = math.tanh %484 : vector<8x32xf32>
    %490 = arith.mulf %488, %489 : vector<8x32xf32>
    %c4_i32_165 = arith.constant 4 : i32
    %491 = arith.cmpi sge, %c7_i32, %c4_i32_165 : i32
    %492 = arith.extui %491 : i1 to i32
    %c0_i32_166 = arith.constant 0 : i32
    %493 = arith.cmpi ne, %492, %c0_i32_166 : i32
    scf.if %493 {
      %c4_i32_177 = arith.constant 4 : i32
      %501 = arith.subi %c7_i32, %c4_i32_177 : i32
      %c8_i32_178 = arith.constant 8 : i32
      %502 = arith.muli %501, %c8_i32_178 : i32
      %503 = tpu.assume_multiple %502, 8 : i32
      %504 = arith.index_cast %503 : i32 to index
      %c0_179 = arith.constant 0 : index
      %505 = vector.load %arg11[%504, %c0_179] : memref<32x32xf32, #tpu.memory_space<vmem>>, vector<8x32xf32>
      tpu.vector_store %arg11[%504, %c0_179], %490 {strides = array<i32>} : memref<32x32xf32, #tpu.memory_space<vmem>>, vector<8x32xf32>,
    } else {
    }
    %c8_i32_167 = arith.constant 8 : i32
    %c0_168 = arith.constant 0 : index
    %c0_169 = arith.constant 0 : index
    %494 = vector.load %arg11[%c0_168, %c0_169] : memref<32x32xf32, #tpu.memory_space<vmem>>, vector<32x32xf32>
    %c0_170 = arith.constant 0 : index
    %c0_171 = arith.constant 0 : index
    %495 = vector.load %arg7[%c0_170, %c0_171] : memref<32x4xf32, #tpu.memory_space<vmem>>, vector<32x4xf32>
    %cst_172 = arith.constant dense<0.000000e+00> : vector<32x4xf32>
    %496 = tpu.matmul %494, %495, %cst_172 {dimension_numbers = #tpu.dot_dimension_numbers<[1], [0], [0], [1], [0, 0, 1, 1], [], []>} : vector<32x32xf32>, vector<32x4xf32>, vector<32x4xf32> -> vector<32x4xf32>
    %c0_173 = arith.constant 0 : index
    %c0_174 = arith.constant 0 : index
    %497 = vector.load %arg8[%c0_173, %c0_174] : memref<1x4xf32, #tpu.memory_space<vmem>>, vector<1x4xf32>
    %498 = vector.broadcast %497 : vector<1x4xf32> to vector<32x4xf32>
    %499 = arith.addf %496, %498 : vector<32x4xf32>
    %c0_175 = arith.constant 0 : index
    %c0_176 = arith.constant 0 : index
    %500 = vector.load %arg9[%c0_175, %c0_176] : memref<32x4xf32, #tpu.memory_space<vmem>>, vector<32x4xf32>
    tpu.vector_store %arg9[%c0_175, %c0_176], %499 {strides = array<i32>} : memref<32x4xf32, #tpu.memory_space<vmem>>, vector<32x4xf32>,
    return
  }
}

</mosaic_0001>

<llo_original>
// kernel: tpu_custom_call.1
$region0: #{tpu_custom_call.1}
  #allocation0 [shape = 'u32[]', space=smem, size = 0x4, offset = 0x4, fixed_abs, tag = 'smem constant byte address 0x4 - core index']
  #allocation1 [shape = 'u32[72,128]{1,0:T(1,128)}', space=vmem, size = 0x9000, scoped, tag = 'internal scratch']
  #allocation2 [shape = 'f32[64,128]{1,0:T(8,128)}', space=vmem, size = 0x8000, scoped, tag = 'scratch operand']
  #allocation3 [shape = 'f32[32,32]{1,0:T(8,128)}', space=vmem, size = 0x4000, scoped, tag = 'scratch operand']
  %s0 = inlined_call_operand.vmem [shape: f32[64,16], index: 0, kind: input, shape index: {}]
  %s1 = inlined_call_operand.vmem [shape: f32[16,128], index: 1, kind: input, shape index: {}]
  %s2 = inlined_call_operand.vmem [shape: bf16[32,128], index: 2, kind: input, shape index: {}]
  %s3 = inlined_call_operand.vmem [shape: f32[1,128], index: 3, kind: input, shape index: {}]
  %s4 = inlined_call_operand.vmem [shape: bf16[32,128], index: 4, kind: input, shape index: {}]
  %s5 = inlined_call_operand.vmem [shape: bf16[32,128], index: 5, kind: input, shape index: {}]
  %s6 = inlined_call_operand.vmem [shape: f32[1,128], index: 6, kind: input, shape index: {}]
  %s7 = inlined_call_operand.vmem [shape: f32[32,4], index: 7, kind: input, shape index: {}]
  %s8 = inlined_call_operand.vmem [shape: f32[1,4], index: 8, kind: input, shape index: {}]
  %s9 = inlined_call_operand.vmem [shape: f32[32,4], index: 9, kind: output, shape index: {}]
  %s10 = sld [smem:[#allocation0]]
  $region46: #{tpu_custom_call.1} parent=0
    _
  %s12 = ssub.s32 1, %s10
  %s13 = scalar_select 0, %s12, %s10
  // Predicated region
  $region2: #{tpu_custom_call.1} parent=0 // pred_check
    _
  $region3: #{tpu_custom_call.1} parent=0 // pred_check_branch
    %15 = sbr.rel (0) target = $region5
  $region4: #{tpu_custom_call.1} parent=0 // pred_region
    _
  $region5: #{tpu_custom_call.1} parent=0 // pred_fallthru
    _
  // Predicated region
  $region6: #{tpu_custom_call.1} parent=0 // pred_check
    _
  $region7: #{tpu_custom_call.1} parent=0 // pred_check_branch
    %17 = sbr.rel (0) target = $region9
  $region8: #{tpu_custom_call.1} parent=0 // pred_region
    _
  $region9: #{tpu_custom_call.1} parent=0 // pred_fallthru
    _
  // Predicated region
  $region10: #{tpu_custom_call.1} parent=0 // pred_check
    _
  $region11: #{tpu_custom_call.1} parent=0 // pred_check_branch
    %19 = sbr.rel (0) target = $region13
  $region12: #{tpu_custom_call.1} parent=0 // pred_region
    _
  $region13: #{tpu_custom_call.1} parent=0 // pred_fallthru
    _
  // Predicated region
  $region14: #{tpu_custom_call.1} parent=0 // pred_check
    _
  $region15: #{tpu_custom_call.1} parent=0 // pred_check_branch
    %21 = sbr.rel (0) target = $region17
  $region16: #{tpu_custom_call.1} parent=0 // pred_region
    _
  $region17: #{tpu_custom_call.1} parent=0 // pred_fallthru
    _
  // Predicated region
  $region18: #{tpu_custom_call.1} parent=0 // pred_check
    _
  $region19: #{tpu_custom_call.1} parent=0 // pred_check_branch
    %23 = sbr.rel (0) target = $region21
  $region20: #{tpu_custom_call.1} parent=0 // pred_region
    _
  $region21: #{tpu_custom_call.1} parent=0 // pred_fallthru
    _
  // Predicated region
  $region22: #{tpu_custom_call.1} parent=0 // pred_check
    _
  $region23: #{tpu_custom_call.1} parent=0 // pred_check_branch
    %25 = sbr.rel (0) target = $region25
  $region24: #{tpu_custom_call.1} parent=0 // pred_region
    _
  $region25: #{tpu_custom_call.1} parent=0 // pred_fallthru
    _
  // Predicated region
  $region26: #{tpu_custom_call.1} parent=0 // pred_check
    _
  $region27: #{tpu_custom_call.1} parent=0 // pred_check_branch
    %27 = sbr.rel (0) target = $region29
  $region28: #{tpu_custom_call.1} parent=0 // pred_region
    _
  $region29: #{tpu_custom_call.1} parent=0 // pred_fallthru
    _
  // Predicated region
  $region30: #{tpu_custom_call.1} parent=0 // pred_check
    _
  $region31: #{tpu_custom_call.1} parent=0 // pred_check_branch
    %29 = sbr.rel (0) target = $region33
  $region32: #{tpu_custom_call.1} parent=0 // pred_region
    _
  $region33: #{tpu_custom_call.1} parent=0 // pred_fallthru
    _
  // Predicated region
  $region34: #{tpu_custom_call.1} parent=0 // pred_check
    _
  $region35: #{tpu_custom_call.1} parent=0 // pred_check_branch
    %31 = sbr.rel (0) target = $region37
  $region36: #{tpu_custom_call.1} parent=0 // pred_region
    _
  $region37: #{tpu_custom_call.1} parent=0 // pred_fallthru
    _
  %v33 = vld [vmem:[%s2] sm:$0xf]
  %v34 = vld [vmem:[%s2 + $0x4] sm:$0xf]
  %v35 = vld [vmem:[%s2 + $0x8] sm:$0xf]
  %v36 = vld [vmem:[%s2 + $0xc] sm:$0xf]
  %v37 = vld [vmem:[%s4] sm:$0xf]
  %v38 = vld [vmem:[%s4 + $0x4] sm:$0xf]
  %v39 = vld [vmem:[%s4 + $0x8] sm:$0xf]
  %v40 = vld [vmem:[%s4 + $0xc] sm:$0xf]
  %v41 = vld [vmem:[%s5] sm:$0xf]
  %v42 = vld [vmem:[%s5 + $0x4] sm:$0xf]
  %v43 = vld [vmem:[%s5 + $0x8] sm:$0xf]
  %v44 = vld [vmem:[%s5 + $0xc] sm:$0xf]
  %v45 = vld [vmem:[%s0] sm:$0xff]
  %v46 = vld [vmem:[%s0 + $0x8] sm:$0xff]
  %v47 = vld [vmem:[%s0 + $0x10] sm:$0xff]
  %v48 = vld [vmem:[%s0 + $0x18] sm:$0xff]
  %v49 = vld [vmem:[%s0 + $0x20] sm:$0xff]
  %v50 = vld [vmem:[%s0 + $0x28] sm:$0xff]
  %v51 = vld [vmem:[%s0 + $0x30] sm:$0xff]
  %v52 = vld [vmem:[%s0 + $0x38] sm:$0xff]
  %v53 = vld [vmem:[%s1] sm:$0xff]
  %v54 = vld [vmem:[%s1 + $0x8] sm:$0xff]
  %v55 = vld [vmem:[%s3] sm:$0x1]
  %v57 = vperm.slane %v55, 0
  %vm59 = vcmask 130048
  %v61 = vsel %vm59, %v45, 0
  %v64 = vsel %vm59, %v46, 0
  %v67 = vsel %vm59, %v47, 0
  %v70 = vsel %vm59, %v48, 0
  %v73 = vsel %vm59, %v49, 0
  %v76 = vsel %vm59, %v50, 0
  %v79 = vsel %vm59, %v51, 0
  %v82 = vsel %vm59, %v52, 0
  %84 = vmatpush.msra.mxu0 0.0
  %85 = vmatpush.msra.mxu0 0.0
  %86 = vmatpush.msra.mxu0 0.0
  %87 = vmatpush.msra.mxu0 0.0
  %88 = vmatpush.msra.mxu0 0.0
  %89 = vmatpush.msra.mxu0 0.0
  %90 = vmatpush.msra.mxu0 0.0
  %91 = vmatpush.msra.mxu0 0.0
  %92 = vmatpush.msra.mxu0 0.0
  %93 = vmatpush.msra.mxu0 0.0
  %94 = vmatpush.msra.mxu0 0.0
  %95 = vmatpush.msra.mxu0 0.0
  %96 = vmatpush.msra.mxu0 0.0
  %97 = vmatpush.msra.mxu0 0.0
  %98 = vmatpush.msra.mxu0 %v54
  %99 = vmatpush.msra.mxu0 %v53
  %100 = vmatmul.f32.gmra.mxu0 %v61
  %v101 = vpop.f32.mrf.mxu0
  %v102 = vadd.f32 %v57, %v101
  %103 = vmatmul.f32.gmra.mxu0 %v64
  %v104 = vpop.f32.mrf.mxu0
  %v105 = vadd.f32 %v57, %v104
  %106 = vmatmul.f32.gmra.mxu0 %v67
  %v107 = vpop.f32.mrf.mxu0
  %v108 = vadd.f32 %v57, %v107
  %109 = vmatmul.f32.gmra.mxu0 %v70
  %v110 = vpop.f32.mrf.mxu0
  %v111 = vadd.f32 %v57, %v110
  %112 = vmatmul.f32.gmra.mxu0 %v73
  %v113 = vpop.f32.mrf.mxu0
  %v114 = vadd.f32 %v57, %v113
  %115 = vmatmul.f32.gmra.mxu0 %v76
  %v116 = vpop.f32.mrf.mxu0
  %v117 = vadd.f32 %v57, %v116
  %118 = vmatmul.f32.gmra.mxu0 %v79
  %v119 = vpop.f32.mrf.mxu0
  %v120 = vadd.f32 %v57, %v119
  %121 = vmatmul.f32.gmra.mxu0 %v82
  %v122 = vpop.f32.mrf.mxu0
  %v123 = vadd.f32 %v57, %v122
  %124 = vdwg.mxu0
  %125 = vst [vmem:[#allocation2] sm:$0xff] %v102
  %126 = vst [vmem:[#allocation2 + $0x8] sm:$0xff] %v105
  %127 = vst [vmem:[#allocation2 + $0x10] sm:$0xff] %v108
  %128 = vst [vmem:[#allocation2 + $0x18] sm:$0xff] %v111
  %129 = vst [vmem:[#allocation2 + $0x20] sm:$0xff] %v114
  %130 = vst [vmem:[#allocation2 + $0x28] sm:$0xff] %v117
  %131 = vst [vmem:[#allocation2 + $0x30] sm:$0xff] %v120
  %132 = vst [vmem:[#allocation2 + $0x38] sm:$0xff] %v123
  %v133 = vld [vmem:[%s6] sm:$0x1]
  %v135 = vperm.slane %v133, 0
  %v137 = vld [vmem:[#allocation2] sm:$0xff]
  %v142 = vunpack.c.l.b16 %v33
  %v143 = vunpack.c.l.b16 %v34
  %v144 = vunpack.c.l.b16 %v35
  %v145 = vunpack.c.l.b16 %v36
  %v146 = vpack.c.b16 %v143, %v142
  %v147 = vpack.c.b16 %v145, %v144
  %vm150 = vcmask 261120
  %v152 = vsel %vm150, 0, 0
  %154 = vmatpush.bf16.msra.mxu0 0
  %155 = vmatpush.bf16.msra.mxu0 0
  %156 = vmatpush.bf16.msra.mxu0 0
  %157 = vmatpush.bf16.msra.mxu0 0
  %158 = vmatpush.bf16.msra.mxu0 0
  %159 = vmatpush.bf16.msra.mxu0 0
  %160 = vmatpush.bf16.msra.mxu0 %v147
  %161 = vmatpush.bf16.msra.mxu0 %v146
  %162 = vmatmul.bf16.gmra.mxu0 %v152
  %v163 = vpop.f32.mrf.mxu0
  %v164 = vadd.f32 0.0, %v163
  %v165 = vpop.f32.mrf.mxu0
  %166 = vdwg.mxu0
  %v167 = vadd.f32 %v137, %v164
  %v168 = vtanh.pop %v167
  %v169 = vmul.f32 %v168, 0.5
  %v170 = vadd.f32 %v169, 0.5
  %v171 = vmul.f32 %v170, 0.0
  %173 = vrot.lane.b32.xlu0 %v168, 64
  %v174 = vpop.permute.xlu0 %173
  %v176 = vmul.f32 %v170, %v174
  %178 = vrot.lane.b32.xlu0 %v176, 32
  %v179 = vpop.permute.xlu0 %178
  %v181 = vadd.f32 %v171, %v179
  %v182 = vtanh.pop %v181
  %184 = vrot.lane.b32.xlu0 %v182, 64
  %v185 = vpop.permute.xlu0 %184
  %v187 = vmul.f32 %v170, %v185
  %v188 = vpack.c.bf16 %v187, %v187
  %190 = vrot.lane.b32.xlu0 %v188, 32
  %v191 = vpop.permute.xlu0 %190
  %v196 = vunpack.c.l.b16 %v37
  %v197 = vunpack.c.l.b16 %v38
  %v198 = vunpack.c.l.b16 %v39
  %v199 = vunpack.c.l.b16 %v40
  %v200 = vpack.c.b16 %v197, %v196
  %v201 = vpack.c.b16 %v199, %v198
  %v205 = vsel %vm150, %v191, 0
  %207 = vmatpush.bf16.msra.mxu0 0
  %208 = vmatpush.bf16.msra.mxu0 0
  %209 = vmatpush.bf16.msra.mxu0 0
  %210 = vmatpush.bf16.msra.mxu0 0
  %211 = vmatpush.bf16.msra.mxu0 0
  %212 = vmatpush.bf16.msra.mxu0 0
  %213 = vmatpush.bf16.msra.mxu0 %v201
  %214 = vmatpush.bf16.msra.mxu0 %v200
  %215 = vmatmul.bf16.gmra.mxu0 %v205
  %v216 = vpop.f32.mrf.mxu0
  %v217 = vadd.f32 0.0, %v216
  %v218 = vpop.f32.mrf.mxu0
  %219 = vdwg.mxu0
  %v224 = vunpack.c.l.b16 %v41
  %v225 = vunpack.c.l.b16 %v42
  %v226 = vunpack.c.l.b16 %v43
  %v227 = vunpack.c.l.b16 %v44
  %v228 = vpack.c.b16 %v225, %v224
  %v229 = vpack.c.b16 %v227, %v226
  %232 = vmatpush.bf16.msra.mxu0 0
  %233 = vmatpush.bf16.msra.mxu0 0
  %234 = vmatpush.bf16.msra.mxu0 0
  %235 = vmatpush.bf16.msra.mxu0 0
  %236 = vmatpush.bf16.msra.mxu0 0
  %237 = vmatpush.bf16.msra.mxu0 0
  %238 = vmatpush.bf16.msra.mxu0 %v229
  %239 = vmatpush.bf16.msra.mxu0 %v228
  %240 = vmatmul.bf16.gmra.mxu0 %v152
  %v241 = vpop.f32.mrf.mxu0
  %v242 = vadd.f32 %v217, %v241
  %v243 = vpop.f32.mrf.mxu0
  %244 = vdwg.mxu0
  %v245 = vadd.f32 %v242, %v135
  %v246 = vtanh.pop %v245
  %v247 = vmul.f32 %v246, 0.5
  %v248 = vadd.f32 %v247, 0.5
  %v249 = vmul.f32 %v248, 0.0
  %251 = vrot.lane.b32.xlu0 %v246, 64
  %v252 = vpop.permute.xlu0 %251
  %v254 = vmul.f32 %v248, %v252
  %256 = vrot.lane.b32.xlu0 %v254, 32
  %v257 = vpop.permute.xlu0 %256
  %v259 = vadd.f32 %v249, %v257
  %v260 = vtanh.pop %v259
  %262 = vrot.lane.b32.xlu0 %v260, 64
  %v263 = vpop.permute.xlu0 %262
  %v265 = vmul.f32 %v248, %v263
  %s266 = scalar_lea.vmem [#allocation2], 8
  %v267 = vld [vmem:[%s266] sm:$0xff]
  %268 = vmatpush.bf16.msra.mxu0 0
  %269 = vmatpush.bf16.msra.mxu0 0
  %270 = vmatpush.bf16.msra.mxu0 0
  %271 = vmatpush.bf16.msra.mxu0 0
  %272 = vmatpush.bf16.msra.mxu0 0
  %273 = vmatpush.bf16.msra.mxu0 0
  %274 = vmatpush.bf16.msra.mxu0 %v147
  %275 = vmatpush.bf16.msra.mxu0 %v146
  %276 = vmatmul.bf16.gmra.mxu0 %v205
  %v277 = vpop.f32.mrf.mxu0
  %v278 = vadd.f32 0.0, %v277
  %v279 = vpop.f32.mrf.mxu0
  %280 = vdwg.mxu0
  %v281 = vadd.f32 %v267, %v278
  %v282 = vtanh.pop %v281
  %v283 = vmul.f32 %v282, 0.5
  %v284 = vadd.f32 %v283, 0.5
  %v285 = vmul.f32 %v284, %v181
  %287 = vrot.lane.b32.xlu0 %v282, 64
  %v288 = vpop.permute.xlu0 %287
  %v290 = vmul.f32 %v284, %v288
  %292 = vrot.lane.b32.xlu0 %v290, 32
  %v293 = vpop.permute.xlu0 %292
  %v295 = vadd.f32 %v285, %v293
  %v296 = vtanh.pop %v295
  %298 = vrot.lane.b32.xlu0 %v296, 64
  %v299 = vpop.permute.xlu0 %298
  %v301 = vmul.f32 %v284, %v299
  %v302 = vpack.c.bf16 %v265, %v265
  %v303 = vpack.c.bf16 %v301, %v301
  %305 = vrot.lane.b32.xlu0 %v303, 32
  %v306 = vpop.permute.xlu0 %305
  %v308 = vsel %vm150, %v306, 0
  %310 = vmatpush.bf16.msra.mxu0 0
  %311 = vmatpush.bf16.msra.mxu0 0
  %312 = vmatpush.bf16.msra.mxu0 0
  %313 = vmatpush.bf16.msra.mxu0 0
  %314 = vmatpush.bf16.msra.mxu0 0
  %315 = vmatpush.bf16.msra.mxu0 0
  %316 = vmatpush.bf16.msra.mxu0 %v201
  %317 = vmatpush.bf16.msra.mxu0 %v200
  %318 = vmatmul.bf16.gmra.mxu0 %v308
  %v319 = vpop.f32.mrf.mxu0
  %v320 = vadd.f32 0.0, %v319
  %v321 = vpop.f32.mrf.mxu0
  %322 = vdwg.mxu0
  %324 = vrot.lane.b32.xlu0 %v302, 32
  %v325 = vpop.permute.xlu0 %324
  %v327 = vsel %vm150, %v325, 0
  %329 = vmatpush.bf16.msra.mxu0 0
  %330 = vmatpush.bf16.msra.mxu0 0
  %331 = vmatpush.bf16.msra.mxu0 0
  %332 = vmatpush.bf16.msra.mxu0 0
  %333 = vmatpush.bf16.msra.mxu0 0
  %334 = vmatpush.bf16.msra.mxu0 0
  %335 = vmatpush.bf16.msra.mxu0 %v229
  %336 = vmatpush.bf16.msra.mxu0 %v228
  %337 = vmatmul.bf16.gmra.mxu0 %v327
  %v338 = vpop.f32.mrf.mxu0
  %v339 = vadd.f32 %v320, %v338
  %v340 = vpop.f32.mrf.mxu0
  %341 = vdwg.mxu0
  %v342 = vadd.f32 %v339, %v135
  %v343 = vtanh.pop %v342
  %v344 = vmul.f32 %v343, 0.5
  %v345 = vadd.f32 %v344, 0.5
  %v346 = vmul.f32 %v345, %v259
  %348 = vrot.lane.b32.xlu0 %v343, 64
  %v349 = vpop.permute.xlu0 %348
  %v351 = vmul.f32 %v345, %v349
  %353 = vrot.lane.b32.xlu0 %v351, 32
  %v354 = vpop.permute.xlu0 %353
  %v356 = vadd.f32 %v346, %v354
  %v357 = vtanh.pop %v356
  %359 = vrot.lane.b32.xlu0 %v357, 64
  %v360 = vpop.permute.xlu0 %359
  %v362 = vmul.f32 %v345, %v360
  %s363 = scalar_lea.vmem [#allocation2], 16
  %v364 = vld [vmem:[%s363] sm:$0xff]
  %365 = vmatpush.bf16.msra.mxu0 0
  %366 = vmatpush.bf16.msra.mxu0 0
  %367 = vmatpush.bf16.msra.mxu0 0
  %368 = vmatpush.bf16.msra.mxu0 0
  %369 = vmatpush.bf16.msra.mxu0 0
  %370 = vmatpush.bf16.msra.mxu0 0
  %371 = vmatpush.bf16.msra.mxu0 %v147
  %372 = vmatpush.bf16.msra.mxu0 %v146
  %373 = vmatmul.bf16.gmra.mxu0 %v308
  %v374 = vpop.f32.mrf.mxu0
  %v375 = vadd.f32 0.0, %v374
  %v376 = vpop.f32.mrf.mxu0
  %377 = vdwg.mxu0
  %v378 = vadd.f32 %v364, %v375
  %v379 = vtanh.pop %v378
  %v380 = vmul.f32 %v379, 0.5
  %v381 = vadd.f32 %v380, 0.5
  %v382 = vmul.f32 %v381, %v295
  %384 = vrot.lane.b32.xlu0 %v379, 64
  %v385 = vpop.permute.xlu0 %384
  %v387 = vmul.f32 %v381, %v385
  %389 = vrot.lane.b32.xlu0 %v387, 32
  %v390 = vpop.permute.xlu0 %389
  %v392 = vadd.f32 %v382, %v390
  %v393 = vtanh.pop %v392
  %395 = vrot.lane.b32.xlu0 %v393, 64
  %v396 = vpop.permute.xlu0 %395
  %v398 = vmul.f32 %v381, %v396
  %v399 = vpack.c.bf16 %v362, %v362
  %v400 = vpack.c.bf16 %v398, %v398
  %402 = vrot.lane.b32.xlu0 %v400, 32
  %v403 = vpop.permute.xlu0 %402
  %v405 = vsel %vm150, %v403, 0
  %407 = vmatpush.bf16.msra.mxu0 0
  %408 = vmatpush.bf16.msra.mxu0 0
  %409 = vmatpush.bf16.msra.mxu0 0
  %410 = vmatpush.bf16.msra.mxu0 0
  %411 = vmatpush.bf16.msra.mxu0 0
  %412 = vmatpush.bf16.msra.mxu0 0
  %413 = vmatpush.bf16.msra.mxu0 %v201
  %414 = vmatpush.bf16.msra.mxu0 %v200
  %415 = vmatmul.bf16.gmra.mxu0 %v405
  %v416 = vpop.f32.mrf.mxu0
  %v417 = vadd.f32 0.0, %v416
  %v418 = vpop.f32.mrf.mxu0
  %419 = vdwg.mxu0
  %421 = vrot.lane.b32.xlu0 %v399, 32
  %v422 = vpop.permute.xlu0 %421
  %v424 = vsel %vm150, %v422, 0
  %426 = vmatpush.bf16.msra.mxu0 0
  %427 = vmatpush.bf16.msra.mxu0 0
  %428 = vmatpush.bf16.msra.mxu0 0
  %429 = vmatpush.bf16.msra.mxu0 0
  %430 = vmatpush.bf16.msra.mxu0 0
  %431 = vmatpush.bf16.msra.mxu0 0
  %432 = vmatpush.bf16.msra.mxu0 %v229
  %433 = vmatpush.bf16.msra.mxu0 %v228
  %434 = vmatmul.bf16.gmra.mxu0 %v424
  %v435 = vpop.f32.mrf.mxu0
  %v436 = vadd.f32 %v417, %v435
  %v437 = vpop.f32.mrf.mxu0
  %438 = vdwg.mxu0
  %v439 = vadd.f32 %v436, %v135
  %v440 = vtanh.pop %v439
  %v441 = vmul.f32 %v440, 0.5
  %v442 = vadd.f32 %v441, 0.5
  %v443 = vmul.f32 %v442, %v356
  %445 = vrot.lane.b32.xlu0 %v440, 64
  %v446 = vpop.permute.xlu0 %445
  %v448 = vmul.f32 %v442, %v446
  %450 = vrot.lane.b32.xlu0 %v448, 32
  %v451 = vpop.permute.xlu0 %450
  %v453 = vadd.f32 %v443, %v451
  %v454 = vtanh.pop %v453
  %456 = vrot.lane.b32.xlu0 %v454, 64
  %v457 = vpop.permute.xlu0 %456
  %v459 = vmul.f32 %v442, %v457
  %s460 = scalar_lea.vmem [#allocation2], 24
  %v461 = vld [vmem:[%s460] sm:$0xff]
  %462 = vmatpush.bf16.msra.mxu0 0
  %463 = vmatpush.bf16.msra.mxu0 0
  %464 = vmatpush.bf16.msra.mxu0 0
  %465 = vmatpush.bf16.msra.mxu0 0
  %466 = vmatpush.bf16.msra.mxu0 0
  %467 = vmatpush.bf16.msra.mxu0 0
  %468 = vmatpush.bf16.msra.mxu0 %v147
  %469 = vmatpush.bf16.msra.mxu0 %v146
  %470 = vmatmul.bf16.gmra.mxu0 %v405
  %v471 = vpop.f32.mrf.mxu0
  %v472 = vadd.f32 0.0, %v471
  %v473 = vpop.f32.mrf.mxu0
  %474 = vdwg.mxu0
  %v475 = vadd.f32 %v461, %v472
  %v476 = vtanh.pop %v475
  %v477 = vmul.f32 %v476, 0.5
  %v478 = vadd.f32 %v477, 0.5
  %v479 = vmul.f32 %v478, %v392
  %481 = vrot.lane.b32.xlu0 %v476, 64
  %v482 = vpop.permute.xlu0 %481
  %v484 = vmul.f32 %v478, %v482
  %486 = vrot.lane.b32.xlu0 %v484, 32
  %v487 = vpop.permute.xlu0 %486
  %v489 = vadd.f32 %v479, %v487
  %v490 = vtanh.pop %v489
  %492 = vrot.lane.b32.xlu0 %v490, 64
  %v493 = vpop.permute.xlu0 %492
  %v495 = vmul.f32 %v478, %v493
  %v496 = vpack.c.bf16 %v459, %v459
  %v497 = vpack.c.bf16 %v495, %v495
  %499 = vrot.lane.b32.xlu0 %v497, 32
  %v500 = vpop.permute.xlu0 %499
  %v502 = vsel %vm150, %v500, 0
  %504 = vmatpush.bf16.msra.mxu0 0
  %505 = vmatpush.bf16.msra.mxu0 0
  %506 = vmatpush.bf16.msra.mxu0 0
  %507 = vmatpush.bf16.msra.mxu0 0
  %508 = vmatpush.bf16.msra.mxu0 0
  %509 = vmatpush.bf16.msra.mxu0 0
  %510 = vmatpush.bf16.msra.mxu0 %v201
  %511 = vmatpush.bf16.msra.mxu0 %v200
  %512 = vmatmul.bf16.gmra.mxu0 %v502
  %v513 = vpop.f32.mrf.mxu0
  %v514 = vadd.f32 0.0, %v513
  %v515 = vpop.f32.mrf.mxu0
  %516 = vdwg.mxu0
  %518 = vrot.lane.b32.xlu0 %v496, 32
  %v519 = vpop.permute.xlu0 %518
  %v521 = vsel %vm150, %v519, 0
  %523 = vmatpush.bf16.msra.mxu0 0
  %524 = vmatpush.bf16.msra.mxu0 0
  %525 = vmatpush.bf16.msra.mxu0 0
  %526 = vmatpush.bf16.msra.mxu0 0
  %527 = vmatpush.bf16.msra.mxu0 0
  %528 = vmatpush.bf16.msra.mxu0 0
  %529 = vmatpush.bf16.msra.mxu0 %v229
  %530 = vmatpush.bf16.msra.mxu0 %v228
  %531 = vmatmul.bf16.gmra.mxu0 %v521
  %v532 = vpop.f32.mrf.mxu0
  %v533 = vadd.f32 %v514, %v532
  %v534 = vpop.f32.mrf.mxu0
  %535 = vdwg.mxu0
  %v536 = vadd.f32 %v533, %v135
  %v537 = vtanh.pop %v536
  %v538 = vmul.f32 %v537, 0.5
  %v539 = vadd.f32 %v538, 0.5
  %v540 = vmul.f32 %v539, %v453
  %542 = vrot.lane.b32.xlu0 %v537, 64
  %v543 = vpop.permute.xlu0 %542
  %v545 = vmul.f32 %v539, %v543
  %547 = vrot.lane.b32.xlu0 %v545, 32
  %v548 = vpop.permute.xlu0 %547
  %v550 = vadd.f32 %v540, %v548
  %v551 = vtanh.pop %v550
  %553 = vrot.lane.b32.xlu0 %v551, 64
  %v554 = vpop.permute.xlu0 %553
  %v556 = vmul.f32 %v539, %v554
  %s557 = scalar_lea.vmem [#allocation2], 32
  %v558 = vld [vmem:[%s557] sm:$0xff]
  %559 = vmatpush.bf16.msra.mxu0 0
  %560 = vmatpush.bf16.msra.mxu0 0
  %561 = vmatpush.bf16.msra.mxu0 0
  %562 = vmatpush.bf16.msra.mxu0 0
  %563 = vmatpush.bf16.msra.mxu0 0
  %564 = vmatpush.bf16.msra.mxu0 0
  %565 = vmatpush.bf16.msra.mxu0 %v147
  %566 = vmatpush.bf16.msra.mxu0 %v146
  %567 = vmatmul.bf16.gmra.mxu0 %v502
  %v568 = vpop.f32.mrf.mxu0
  %v569 = vadd.f32 0.0, %v568
  %v570 = vpop.f32.mrf.mxu0
  %571 = vdwg.mxu0
  %v572 = vadd.f32 %v558, %v569
  %v573 = vtanh.pop %v572
  %v574 = vmul.f32 %v573, 0.5
  %v575 = vadd.f32 %v574, 0.5
  %v576 = vmul.f32 %v575, %v489
  %578 = vrot.lane.b32.xlu0 %v573, 64
  %v579 = vpop.permute.xlu0 %578
  %v581 = vmul.f32 %v575, %v579
  %583 = vrot.lane.b32.xlu0 %v581, 32
  %v584 = vpop.permute.xlu0 %583
  %v586 = vadd.f32 %v576, %v584
  %v587 = vtanh.pop %v586
  %589 = vrot.lane.b32.xlu0 %v587, 64
  %v590 = vpop.permute.xlu0 %589
  %v592 = vmul.f32 %v575, %v590
  %v593 = vpack.c.bf16 %v556, %v556
  %v594 = vpack.c.bf16 %v592, %v592
  %596 = vrot.lane.b32.xlu0 %v594, 32
  %v597 = vpop.permute.xlu0 %596
  %v599 = vsel %vm150, %v597, 0
  %601 = vmatpush.bf16.msra.mxu0 0
  %602 = vmatpush.bf16.msra.mxu0 0
  %603 = vmatpush.bf16.msra.mxu0 0
  %604 = vmatpush.bf16.msra.mxu0 0
  %605 = vmatpush.bf16.msra.mxu0 0
  %606 = vmatpush.bf16.msra.mxu0 0
  %607 = vmatpush.bf16.msra.mxu0 %v201
  %608 = vmatpush.bf16.msra.mxu0 %v200
  %609 = vmatmul.bf16.gmra.mxu0 %v599
  %v610 = vpop.f32.mrf.mxu0
  %v611 = vadd.f32 0.0, %v610
  %v612 = vpop.f32.mrf.mxu0
  %613 = vdwg.mxu0
  %615 = vrot.lane.b32.xlu0 %v593, 32
  %v616 = vpop.permute.xlu0 %615
  %v618 = vsel %vm150, %v616, 0
  %620 = vmatpush.bf16.msra.mxu0 0
  %621 = vmatpush.bf16.msra.mxu0 0
  %622 = vmatpush.bf16.msra.mxu0 0
  %623 = vmatpush.bf16.msra.mxu0 0
  %624 = vmatpush.bf16.msra.mxu0 0
  %625 = vmatpush.bf16.msra.mxu0 0
  %626 = vmatpush.bf16.msra.mxu0 %v229
  %627 = vmatpush.bf16.msra.mxu0 %v228
  %628 = vmatmul.bf16.gmra.mxu0 %v618
  %v629 = vpop.f32.mrf.mxu0
  %v630 = vadd.f32 %v611, %v629
  %v631 = vpop.f32.mrf.mxu0
  %632 = vdwg.mxu0
  %v633 = vadd.f32 %v630, %v135
  %v634 = vtanh.pop %v633
  %v635 = vmul.f32 %v634, 0.5
  %v636 = vadd.f32 %v635, 0.5
  %v637 = vmul.f32 %v636, %v550
  %639 = vrot.lane.b32.xlu0 %v634, 64
  %v640 = vpop.permute.xlu0 %639
  %v642 = vmul.f32 %v636, %v640
  %644 = vrot.lane.b32.xlu0 %v642, 32
  %v645 = vpop.permute.xlu0 %644
  %v647 = vadd.f32 %v637, %v645
  %v648 = vtanh.pop %v647
  %650 = vrot.lane.b32.xlu0 %v648, 64
  %v651 = vpop.permute.xlu0 %650
  %v653 = vmul.f32 %v636, %v651
  %655 = vrot.lane.b32.xlu0 %v653, 32
  %v656 = vpop.permute.xlu0 %655
  %658 = vst.msk [vmem:[#allocation3] sm:$0xff] %vm150, %v656
  %s659 = scalar_lea.vmem [#allocation2], 40
  %v660 = vld [vmem:[%s659] sm:$0xff]
  %661 = vmatpush.bf16.msra.mxu0 0
  %662 = vmatpush.bf16.msra.mxu0 0
  %663 = vmatpush.bf16.msra.mxu0 0
  %664 = vmatpush.bf16.msra.mxu0 0
  %665 = vmatpush.bf16.msra.mxu0 0
  %666 = vmatpush.bf16.msra.mxu0 0
  %667 = vmatpush.bf16.msra.mxu0 %v147
  %668 = vmatpush.bf16.msra.mxu0 %v146
  %669 = vmatmul.bf16.gmra.mxu0 %v599
  %v670 = vpop.f32.mrf.mxu0
  %v671 = vadd.f32 0.0, %v670
  %v672 = vpop.f32.mrf.mxu0
  %673 = vdwg.mxu0
  %v674 = vadd.f32 %v660, %v671
  %v675 = vtanh.pop %v674
  %v676 = vmul.f32 %v675, 0.5
  %v677 = vadd.f32 %v676, 0.5
  %v678 = vmul.f32 %v677, %v586
  %680 = vrot.lane.b32.xlu0 %v675, 64
  %v681 = vpop.permute.xlu0 %680
  %v683 = vmul.f32 %v677, %v681
  %685 = vrot.lane.b32.xlu0 %v683, 32
  %v686 = vpop.permute.xlu0 %685
  %v688 = vadd.f32 %v678, %v686
  %v689 = vtanh.pop %v688
  %691 = vrot.lane.b32.xlu0 %v689, 64
  %v692 = vpop.permute.xlu0 %691
  %v694 = vmul.f32 %v677, %v692
  %v695 = vpack.c.bf16 %v653, %v653
  %v696 = vpack.c.bf16 %v694, %v694
  %698 = vrot.lane.b32.xlu0 %v696, 32
  %v699 = vpop.permute.xlu0 %698
  %v701 = vsel %vm150, %v699, 0
  %703 = vmatpush.bf16.msra.mxu0 0
  %704 = vmatpush.bf16.msra.mxu0 0
  %705 = vmatpush.bf16.msra.mxu0 0
  %706 = vmatpush.bf16.msra.mxu0 0
  %707 = vmatpush.bf16.msra.mxu0 0
  %708 = vmatpush.bf16.msra.mxu0 0
  %709 = vmatpush.bf16.msra.mxu0 %v201
  %710 = vmatpush.bf16.msra.mxu0 %v200
  %711 = vmatmul.bf16.gmra.mxu0 %v701
  %v712 = vpop.f32.mrf.mxu0
  %v713 = vadd.f32 0.0, %v712
  %v714 = vpop.f32.mrf.mxu0
  %715 = vdwg.mxu0
  %717 = vrot.lane.b32.xlu0 %v695, 32
  %v718 = vpop.permute.xlu0 %717
  %v720 = vsel %vm150, %v718, 0
  %722 = vmatpush.bf16.msra.mxu0 0
  %723 = vmatpush.bf16.msra.mxu0 0
  %724 = vmatpush.bf16.msra.mxu0 0
  %725 = vmatpush.bf16.msra.mxu0 0
  %726 = vmatpush.bf16.msra.mxu0 0
  %727 = vmatpush.bf16.msra.mxu0 0
  %728 = vmatpush.bf16.msra.mxu0 %v229
  %729 = vmatpush.bf16.msra.mxu0 %v228
  %730 = vmatmul.bf16.gmra.mxu0 %v720
  %v731 = vpop.f32.mrf.mxu0
  %v732 = vadd.f32 %v713, %v731
  %v733 = vpop.f32.mrf.mxu0
  %734 = vdwg.mxu0
  %v735 = vadd.f32 %v732, %v135
  %v736 = vtanh.pop %v735
  %v737 = vmul.f32 %v736, 0.5
  %v738 = vadd.f32 %v737, 0.5
  %v739 = vmul.f32 %v738, %v647
  %741 = vrot.lane.b32.xlu0 %v736, 64
  %v742 = vpop.permute.xlu0 %741
  %v744 = vmul.f32 %v738, %v742
  %746 = vrot.lane.b32.xlu0 %v744, 32
  %v747 = vpop.permute.xlu0 %746
  %v749 = vadd.f32 %v739, %v747
  %v750 = vtanh.pop %v749
  %752 = vrot.lane.b32.xlu0 %v750, 64
  %v753 = vpop.permute.xlu0 %752
  %v755 = vmul.f32 %v738, %v753
  %757 = vrot.lane.b32.xlu0 %v755, 32
  %v758 = vpop.permute.xlu0 %757
  %s760 = scalar_lea.vmem [#allocation3], 8
  %761 = vst.msk [vmem:[%s760] sm:$0xff] %vm150, %v758
  %s762 = scalar_lea.vmem [#allocation2], 48
  %v763 = vld [vmem:[%s762] sm:$0xff]
  %764 = vmatpush.bf16.msra.mxu0 0
  %765 = vmatpush.bf16.msra.mxu0 0
  %766 = vmatpush.bf16.msra.mxu0 0
  %767 = vmatpush.bf16.msra.mxu0 0
  %768 = vmatpush.bf16.msra.mxu0 0
  %769 = vmatpush.bf16.msra.mxu0 0
  %770 = vmatpush.bf16.msra.mxu0 %v147
  %771 = vmatpush.bf16.msra.mxu0 %v146
  %772 = vmatmul.bf16.gmra.mxu0 %v701
  %v773 = vpop.f32.mrf.mxu0
  %v774 = vadd.f32 0.0, %v773
  %v775 = vpop.f32.mrf.mxu0
  %776 = vdwg.mxu0
  %v777 = vadd.f32 %v763, %v774
  %v778 = vtanh.pop %v777
  %v779 = vmul.f32 %v778, 0.5
  %v780 = vadd.f32 %v779, 0.5
  %v781 = vmul.f32 %v780, %v688
  %783 = vrot.lane.b32.xlu0 %v778, 64
  %v784 = vpop.permute.xlu0 %783
  %v786 = vmul.f32 %v780, %v784
  %788 = vrot.lane.b32.xlu0 %v786, 32
  %v789 = vpop.permute.xlu0 %788
  %v791 = vadd.f32 %v781, %v789
  %v792 = vtanh.pop %v791
  %794 = vrot.lane.b32.xlu0 %v792, 64
  %v795 = vpop.permute.xlu0 %794
  %v797 = vmul.f32 %v780, %v795
  %v798 = vpack.c.bf16 %v755, %v755
  %v799 = vpack.c.bf16 %v797, %v797
  %801 = vrot.lane.b32.xlu0 %v799, 32
  %v802 = vpop.permute.xlu0 %801
  %v804 = vsel %vm150, %v802, 0
  %806 = vmatpush.bf16.msra.mxu0 0
  %807 = vmatpush.bf16.msra.mxu0 0
  %808 = vmatpush.bf16.msra.mxu0 0
  %809 = vmatpush.bf16.msra.mxu0 0
  %810 = vmatpush.bf16.msra.mxu0 0
  %811 = vmatpush.bf16.msra.mxu0 0
  %812 = vmatpush.bf16.msra.mxu0 %v201
  %813 = vmatpush.bf16.msra.mxu0 %v200
  %814 = vmatmul.bf16.gmra.mxu0 %v804
  %v815 = vpop.f32.mrf.mxu0
  %v816 = vadd.f32 0.0, %v815
  %v817 = vpop.f32.mrf.mxu0
  %818 = vdwg.mxu0
  %820 = vrot.lane.b32.xlu0 %v798, 32
  %v821 = vpop.permute.xlu0 %820
  %v823 = vsel %vm150, %v821, 0
  %825 = vmatpush.bf16.msra.mxu0 0
  %826 = vmatpush.bf16.msra.mxu0 0
  %827 = vmatpush.bf16.msra.mxu0 0
  %828 = vmatpush.bf16.msra.mxu0 0
  %829 = vmatpush.bf16.msra.mxu0 0
  %830 = vmatpush.bf16.msra.mxu0 0
  %831 = vmatpush.bf16.msra.mxu0 %v229
  %832 = vmatpush.bf16.msra.mxu0 %v228
  %833 = vmatmul.bf16.gmra.mxu0 %v823
  %v834 = vpop.f32.mrf.mxu0
  %v835 = vadd.f32 %v816, %v834
  %v836 = vpop.f32.mrf.mxu0
  %837 = vdwg.mxu0
  %v838 = vadd.f32 %v835, %v135
  %v839 = vtanh.pop %v838
  %v840 = vmul.f32 %v839, 0.5
  %v841 = vadd.f32 %v840, 0.5
  %v842 = vmul.f32 %v841, %v749
  %844 = vrot.lane.b32.xlu0 %v839, 64
  %v845 = vpop.permute.xlu0 %844
  %v847 = vmul.f32 %v841, %v845
  %849 = vrot.lane.b32.xlu0 %v847, 32
  %v850 = vpop.permute.xlu0 %849
  %v852 = vadd.f32 %v842, %v850
  %v853 = vtanh.pop %v852
  %855 = vrot.lane.b32.xlu0 %v853, 64
  %v856 = vpop.permute.xlu0 %855
  %v858 = vmul.f32 %v841, %v856
  %860 = vrot.lane.b32.xlu0 %v858, 32
  %v861 = vpop.permute.xlu0 %860
  %s863 = scalar_lea.vmem [#allocation3], 16
  %864 = vst.msk [vmem:[%s863] sm:$0xff] %vm150, %v861
  %s865 = scalar_lea.vmem [#allocation2], 56
  %v866 = vld [vmem:[%s865] sm:$0xff]
  %867 = vmatpush.bf16.msra.mxu0 0
  %868 = vmatpush.bf16.msra.mxu0 0
  %869 = vmatpush.bf16.msra.mxu0 0
  %870 = vmatpush.bf16.msra.mxu0 0
  %871 = vmatpush.bf16.msra.mxu0 0
  %872 = vmatpush.bf16.msra.mxu0 0
  %873 = vmatpush.bf16.msra.mxu0 %v147
  %874 = vmatpush.bf16.msra.mxu0 %v146
  %875 = vmatmul.bf16.gmra.mxu0 %v804
  %v876 = vpop.f32.mrf.mxu0
  %v877 = vadd.f32 0.0, %v876
  %v878 = vpop.f32.mrf.mxu0
  %879 = vdwg.mxu0
  %v880 = vadd.f32 %v866, %v877
  %v881 = vtanh.pop %v880
  %v882 = vmul.f32 %v881, 0.5
  %v883 = vadd.f32 %v882, 0.5
  %v884 = vmul.f32 %v883, %v791
  %886 = vrot.lane.b32.xlu0 %v881, 64
  %v887 = vpop.permute.xlu0 %886
  %v889 = vmul.f32 %v883, %v887
  %891 = vrot.lane.b32.xlu0 %v889, 32
  %v892 = vpop.permute.xlu0 %891
  %v894 = vadd.f32 %v884, %v892
  %v895 = vtanh.pop %v894
  %897 = vrot.lane.b32.xlu0 %v895, 64
  %v898 = vpop.permute.xlu0 %897
  %v900 = vmul.f32 %v883, %v898
  %v901 = vpack.c.bf16 %v858, %v858
  %v902 = vpack.c.bf16 %v900, %v900
  %904 = vrot.lane.b32.xlu0 %v902, 32
  %v905 = vpop.permute.xlu0 %904
  %v907 = vsel %vm150, %v905, 0
  %909 = vmatpush.bf16.msra.mxu0 0
  %910 = vmatpush.bf16.msra.mxu0 0
  %911 = vmatpush.bf16.msra.mxu0 0
  %912 = vmatpush.bf16.msra.mxu0 0
  %913 = vmatpush.bf16.msra.mxu0 0
  %914 = vmatpush.bf16.msra.mxu0 0
  %915 = vmatpush.bf16.msra.mxu0 %v201
  %916 = vmatpush.bf16.msra.mxu0 %v200
  %917 = vmatmul.bf16.gmra.mxu0 %v907
  %v918 = vpop.f32.mrf.mxu0
  %v919 = vadd.f32 0.0, %v918
  %v920 = vpop.f32.mrf.mxu0
  %921 = vdwg.mxu0
  %923 = vrot.lane.b32.xlu0 %v901, 32
  %v924 = vpop.permute.xlu0 %923
  %v926 = vsel %vm150, %v924, 0
  %928 = vmatpush.bf16.msra.mxu0 0
  %929 = vmatpush.bf16.msra.mxu0 0
  %930 = vmatpush.bf16.msra.mxu0 0
  %931 = vmatpush.bf16.msra.mxu0 0
  %932 = vmatpush.bf16.msra.mxu0 0
  %933 = vmatpush.bf16.msra.mxu0 0
  %934 = vmatpush.bf16.msra.mxu0 %v229
  %935 = vmatpush.bf16.msra.mxu0 %v228
  %936 = vmatmul.bf16.gmra.mxu0 %v926
  %v937 = vpop.f32.mrf.mxu0
  %v938 = vadd.f32 %v919, %v937
  %v939 = vpop.f32.mrf.mxu0
  %940 = vdwg.mxu0
  %v941 = vadd.f32 %v938, %v135
  %v942 = vtanh.pop %v941
  %v943 = vmul.f32 %v942, 0.5
  %v944 = vadd.f32 %v943, 0.5
  %v945 = vmul.f32 %v944, %v852
  %947 = vrot.lane.b32.xlu0 %v942, 64
  %v948 = vpop.permute.xlu0 %947
  %v950 = vmul.f32 %v944, %v948
  %952 = vrot.lane.b32.xlu0 %v950, 32
  %v953 = vpop.permute.xlu0 %952
  %v955 = vadd.f32 %v945, %v953
  %v956 = vtanh.pop %v955
  %958 = vrot.lane.b32.xlu0 %v956, 64
  %v959 = vpop.permute.xlu0 %958
  %v961 = vmul.f32 %v944, %v959
  %963 = vrot.lane.b32.xlu0 %v961, 32
  %v964 = vpop.permute.xlu0 %963
  %s966 = scalar_lea.vmem [#allocation3], 24
  %967 = vst.msk [vmem:[%s966] sm:$0xff] %vm150, %v964
  %v968 = vld [vmem:[#allocation3] sm:$0xff]
  %v969 = vld [vmem:[#allocation3 + $0x8] sm:$0xff]
  %v970 = vld [vmem:[#allocation3 + $0x10] sm:$0xff]
  %v971 = vld [vmem:[#allocation3 + $0x18] sm:$0xff]
  %v972 = vld [vmem:[%s7] sm:$0xff]
  %v973 = vld [vmem:[%s7 + $0x8] sm:$0xff]
  %v974 = vld [vmem:[%s7 + $0x10] sm:$0xff]
  %v975 = vld [vmem:[%s7 + $0x18] sm:$0xff]
  %v976 = vld [vmem:[%s8] sm:$0x1]
  %v978 = vperm.slane %v976, 0
  %v981 = vsel %vm150, %v968, 0
  %v984 = vsel %vm150, %v969, 0
  %v987 = vsel %vm150, %v970, 0
  %v990 = vsel %vm150, %v971, 0
  %992 = vmatpush.msra.mxu0 0.0
  %993 = vmatpush.msra.mxu0 0.0
  %994 = vmatpush.msra.mxu0 0.0
  %995 = vmatpush.msra.mxu0 0.0
  %996 = vmatpush.msra.mxu0 0.0
  %997 = vmatpush.msra.mxu0 0.0
  %998 = vmatpush.msra.mxu0 0.0
  %999 = vmatpush.msra.mxu0 0.0
  %1000 = vmatpush.msra.mxu0 0.0
  %1001 = vmatpush.msra.mxu0 0.0
  %1002 = vmatpush.msra.mxu0 0.0
  %1003 = vmatpush.msra.mxu0 0.0
  %1004 = vmatpush.msra.mxu0 %v975
  %1005 = vmatpush.msra.mxu0 %v974
  %1006 = vmatpush.msra.mxu0 %v973
  %1007 = vmatpush.msra.mxu0 %v972
  %1008 = vmatmul.f32.gmra.mxu0 %v981
  %v1009 = vpop.f32.mrf.mxu0
  %v1010 = vadd.f32 %v978, %v1009
  %1011 = vmatmul.f32.gmra.mxu0 %v984
  %v1012 = vpop.f32.mrf.mxu0
  %v1013 = vadd.f32 %v978, %v1012
  %1014 = vmatmul.f32.gmra.mxu0 %v987
  %v1015 = vpop.f32.mrf.mxu0
  %v1016 = vadd.f32 %v978, %v1015
  %1017 = vmatmul.f32.gmra.mxu0 %v990
  %v1018 = vpop.f32.mrf.mxu0
  %v1019 = vadd.f32 %v978, %v1018
  %1020 = vdwg.mxu0
  %vm1021 = vcmask 31744
  %1022 = vst.msk [vmem:[%s9] sm:$0xff] %vm1021, %v1010
  %1023 = vst.msk [vmem:[%s9 + $0x8] sm:$0xff] %vm1021, %v1013
  %1024 = vst.msk [vmem:[%s9 + $0x10] sm:$0xff] %vm1021, %v1016
  %1025 = vst.msk [vmem:[%s9 + $0x18] sm:$0xff] %vm1021, %v1019
  // Predicated region
  $region38: #{tpu_custom_call.1} parent=0 // pred_check
    _
  $region39: #{tpu_custom_call.1} parent=0 // pred_check_branch
    %1027 = sbr.rel (0) target = $region41
  $region40: #{tpu_custom_call.1} parent=0 // pred_region
    _
  $region41: #{tpu_custom_call.1} parent=0 // pred_fallthru
    _
  // Predicated region
  $region42: #{tpu_custom_call.1} parent=0 // pred_check
    _
  $region43: #{tpu_custom_call.1} parent=0 // pred_check_branch
    %1029 = sbr.rel (0) target = $region45
  $region44: #{tpu_custom_call.1} parent=0 // pred_region
    _
  $region45: #{tpu_custom_call.1} parent=0 // pred_fallthru
    _

</llo_original>
